<compile_context>
chip_gen: v6e
topology: v6e:2x2x1
jax: 0.10.0
libtpu: 0.0.40
codegen_flags: <defaults>
</compile_context>

<pallas_src>
import jax
import jax.numpy as jnp
import numpy as np
from jax.experimental import pallas as pl
from jax.experimental.pallas import tpu as pltpu


def _lstm_decoder_kernel(latent_ref, wl_ref, bl_ref, wih_ref,
                         wcomb_ref, bcomb_ref, wfc_ref, bfc_ref,
                         out_ref, hs_ref):
    B = latent_ref.shape[0]
    H, O = wfc_ref.shape
    T = out_ref.shape[0] // B

    # Hoist weight loads and bias broadcasts out of the recurrence.
    wcomb = wcomb_ref[...]                                    # (H, 4H)
    wfc = wfc_ref[...]                                        # (H, O)
    bcomb_b = jnp.broadcast_to(bcomb_ref[...], (B, 4 * H))
    bfc_b = jnp.broadcast_to(bfc_ref[...], (B, O))

    # h_0 = latent_to_hidden(latent); c_0 = 0.
    h = (jnp.dot(latent_ref[...], wl_ref[...],
                 preferred_element_type=jnp.float32)
         + jnp.broadcast_to(bl_ref[...], (B, H)))
    c = jnp.zeros((B, H), jnp.float32)

    # The fc feedback is fused into wcomb/bcomb.  At t == 0 the true LSTM
    # input is zero (not fc(h_0)), so subtract this once-computed correction
    # instead of keeping a second (H, 4H) weight (w_hh^T) resident in VMEM.
    corr0 = jnp.dot(
        jnp.dot(h, wfc, preferred_element_type=jnp.float32) + bfc_b,
        wih_ref[...], preferred_element_type=jnp.float32)      # (B, 4H)

    # Fully-unrolled recurrence (T is a small static constant).
    for t in range(T):
        # Single gates matmul on the serial dependency chain.
        pre = jnp.dot(h, wcomb, preferred_element_type=jnp.float32) + bcomb_b
        if t == 0:
            pre = pre - corr0

        # Gate order (permuted in the wrapper): i, f, o, g.
        sig = jax.nn.sigmoid(pre[:, :3 * H])   # EUP: sigmoid on 3H cols only
        i_g = sig[:, 0 * H:1 * H]
        f_g = sig[:, 1 * H:2 * H]
        o_g = sig[:, 2 * H:3 * H]
        g_g = jnp.tanh(pre[:, 3 * H:4 * H])    # EUP: tanh on H cols only

        c = f_g * c + i_g * g_g
        h = o_g * jnp.tanh(c)

        # Tile-aligned VMEM stash of h_t (B is padded to a multiple of 8).
        hs_ref[t * B:(t + 1) * B, :] = h

    # Deferred fc: one (T*B, H) @ (H, O) MXU op and one store for the whole
    # output instead of T tiny matmuls / T masked partial stores.
    y = (jnp.dot(hs_ref[...], wfc, preferred_element_type=jnp.float32)
         + jnp.broadcast_to(bfc_ref[...], (T * B, O)))
    out_ref[...] = y


def lstm_decoder_forward(latent, params, sequence_length):
    """latent: (B, L) float32 -> (B, sequence_length, output_size) float32."""
    B, _ = latent.shape
    T = int(sequence_length)
    H = params["w_hh"].shape[1]
    O = params["w_fc"].shape[0]

    # Permute gate blocks from PyTorch order (i, f, g, o) to (i, f, o, g) so
    # the kernel can split sigmoid (3H cols) / tanh (H cols) with two slices.
    def perm_gates(m, axis):
        i, f, g, o = jnp.split(m, 4, axis=axis)
        return jnp.concatenate([i, f, o, g], axis=axis)

    wl_t = params["w_l2h"].T                                    # (L, H)
    bl = params["b_l2h"][None, :]                               # (1, H)
    wih_t = perm_gates(params["w_ih"].T, axis=1)                # (O, 4H)
    whh_t = perm_gates(params["w_hh"].T, axis=1)                # (H, 4H)
    bg = perm_gates((params["b_ih"] + params["b_hh"])[None, :], axis=1)
    wfc_t = params["w_fc"].T                                    # (H, O)
    bfc = params["b_fc"][None, :]                               # (1, O)

    # Algebraic fusion of the fc feedback into the recurrent matmul.
    wcomb = whh_t + wfc_t @ wih_t                               # (H, 4H)
    bcomb = bg + bfc @ wih_t                                    # (1, 4H)

    # Pad batch to the f32 sublane tile (8 rows).
    B_pad = -(-B // 8) * 8
    latent_p = (jnp.pad(latent, ((0, B_pad - B), (0, 0)))
                if B_pad != B else latent)

    args = (latent_p, wl_t, bl, wih_t, wcomb, bcomb, wfc_t, bfc)

    # Size the scoped-VMEM limit from actual resident bytes (+ headroom).
    resident = sum(int(a.size) * a.dtype.itemsize for a in args)
    resident += T * B_pad * (O + H) * 4          # output + hidden scratch
    vmem_limit = int(min(max(8 * resident, 4 << 20), 64 << 20))

    vmem = pl.BlockSpec(memory_space=pltpu.MemorySpace.VMEM)
    out = pl.pallas_call(
        _lstm_decoder_kernel,
        out_shape=jax.ShapeDtypeStruct((T * B_pad, O), jnp.float32),
        in_specs=[vmem] * len(args),
        out_specs=vmem,
        scratch_shapes=[pltpu.VMEM((T * B_pad, H), jnp.float32)],
        compiler_params=pltpu.CompilerParams(vmem_limit_bytes=vmem_limit),
    )(*args)

    # Lane-dense flat kernel output -> (B, T, O); tiny wrapper-side relayout.
    return jnp.transpose(out.reshape(T, B_pad, O), (1, 0, 2))[:B]


def lstm_decoder_reference(latent, params, sequence_length):
    """Pure-JAX reference mirroring the PyTorch forward exactly (unfused)."""
    B = latent.shape[0]
    H = params["w_hh"].shape[1]
    O = params["w_fc"].shape[0]
    h = latent @ params["w_l2h"].T + params["b_l2h"]
    c = jnp.zeros_like(h)
    x = jnp.zeros((B, O), jnp.float32)
    outs = []
    for _ in range(sequence_length):
        gates = (x @ params["w_ih"].T + params["b_ih"]
                 + h @ params["w_hh"].T + params["b_hh"])
        i_g = jax.nn.sigmoid(gates[:, 0 * H:1 * H])
        f_g = jax.nn.sigmoid(gates[:, 1 * H:2 * H])
        g_g = jnp.tanh(gates[:, 2 * H:3 * H])
        o_g = jax.nn.sigmoid(gates[:, 3 * H:4 * H])
        c = f_g * c + i_g * g_g
        h = o_g * jnp.tanh(c)
        x = h @ params["w_fc"].T + params["b_fc"]
        outs.append(x[:, None, :])
    return jnp.concatenate(outs, axis=1)


def init_params(key, latent_size, hidden_size, output_size):
    ks = jax.random.split(key, 8)
    s = lambda fan_in: 1.0 / np.sqrt(fan_in)
    u = lambda k, shape, b: jax.random.uniform(k, shape, jnp.float32, -b, b)
    return {
        "w_l2h": u(ks[0], (hidden_size, latent_size), s(latent_size)),
        "b_l2h": u(ks[1], (hidden_size,), s(latent_size)),
        "w_ih":  u(ks[2], (4 * hidden_size, output_size), s(hidden_size)),
        "b_ih":  u(ks[3], (4 * hidden_size,), s(hidden_size)),
        "w_hh":  u(ks[4], (4 * hidden_size, hidden_size), s(hidden_size)),
        "b_hh":  u(ks[5], (4 * hidden_size,), s(hidden_size)),
        "w_fc":  u(ks[6], (output_size, hidden_size), s(hidden_size)),
        "b_fc":  u(ks[7], (output_size,), s(hidden_size)),
    }


if __name__ == "__main__":
    B, LATENT, HIDDEN, OUT, SEQ = 2, 16, 32, 8, 8

    key = jax.random.PRNGKey(0)
    kp, kx = jax.random.split(key)
    params = init_params(kp, LATENT, HIDDEN, OUT)
    latent = jax.random.normal(kx, (B, LATENT), jnp.float32)

    out = lstm_decoder_forward(latent, params, SEQ)
    out = jax.block_until_ready(out)

    ref = lstm_decoder_reference(latent, params, SEQ)
    # Fusing fc feedback into wcomb (and the t==0 correction) changes f32
    # rounding vs the literal 3-matmul formulation; tolerances reflect that.
    np.testing.assert_allclose(np.asarray(out), np.asarray(ref),
                               rtol=5e-4, atol=1e-5)
    assert out.shape == (B, SEQ, OUT)
    print("KERNEL_OK")
</pallas_src>

<mosaic_0001>
module attributes {stable_mosaic.version = 11 : i64} {
  func.func @_lstm_decoder_kernel(%arg0: memref<8x16xf32, #tpu.memory_space<vmem>>, %arg1: memref<16x32xf32, #tpu.memory_space<vmem>>, %arg2: memref<1x32xf32, #tpu.memory_space<vmem>>, %arg3: memref<8x128xf32, #tpu.memory_space<vmem>>, %arg4: memref<32x128xf32, #tpu.memory_space<vmem>>, %arg5: memref<1x128xf32, #tpu.memory_space<vmem>>, %arg6: memref<32x8xf32, #tpu.memory_space<vmem>>, %arg7: memref<1x8xf32, #tpu.memory_space<vmem>>, %arg8: memref<64x8xf32, #tpu.memory_space<vmem>>, %arg9: memref<64x32xf32, #tpu.memory_space<vmem>>) attributes {dimension_semantics = [], scalar_prefetch = 0 : i64, scratch_operands = 1 : i64, tpu.core_type = #tpu.core_type<tc>} {
    %c0 = arith.constant 0 : index
    %c0_0 = arith.constant 0 : index
    %0 = vector.load %arg4[%c0, %c0_0] : memref<32x128xf32, #tpu.memory_space<vmem>>, vector<32x128xf32>
    %c0_1 = arith.constant 0 : index
    %c0_2 = arith.constant 0 : index
    %1 = vector.load %arg6[%c0_1, %c0_2] : memref<32x8xf32, #tpu.memory_space<vmem>>, vector<32x8xf32>
    %c0_3 = arith.constant 0 : index
    %c0_4 = arith.constant 0 : index
    %2 = vector.load %arg5[%c0_3, %c0_4] : memref<1x128xf32, #tpu.memory_space<vmem>>, vector<1x128xf32>
    %3 = vector.shape_cast %2 : vector<1x128xf32> to vector<1x128xf32>
    %4 = vector.broadcast %3 : vector<1x128xf32> to vector<8x128xf32>
    %c0_5 = arith.constant 0 : index
    %c0_6 = arith.constant 0 : index
    %5 = vector.load %arg7[%c0_5, %c0_6] : memref<1x8xf32, #tpu.memory_space<vmem>>, vector<1x8xf32>
    %6 = vector.shape_cast %5 : vector<1x8xf32> to vector<1x8xf32>
    %7 = vector.broadcast %6 : vector<1x8xf32> to vector<8x8xf32>
    %c0_7 = arith.constant 0 : index
    %c0_8 = arith.constant 0 : index
    %8 = vector.load %arg0[%c0_7, %c0_8] : memref<8x16xf32, #tpu.memory_space<vmem>>, vector<8x16xf32>
    %c0_9 = arith.constant 0 : index
    %c0_10 = arith.constant 0 : index
    %9 = vector.load %arg1[%c0_9, %c0_10] : memref<16x32xf32, #tpu.memory_space<vmem>>, vector<16x32xf32>
    %cst = arith.constant dense<0.000000e+00> : vector<8x32xf32>
    %10 = tpu.matmul %8, %9, %cst {dimension_numbers = #tpu.dot_dimension_numbers<[1], [0], [0], [1], [0, 0, 1, 1], [], []>} : vector<8x16xf32>, vector<16x32xf32>, vector<8x32xf32> -> vector<8x32xf32>
    %c0_11 = arith.constant 0 : index
    %c0_12 = arith.constant 0 : index
    %11 = vector.load %arg2[%c0_11, %c0_12] : memref<1x32xf32, #tpu.memory_space<vmem>>, vector<1x32xf32>
    %12 = vector.shape_cast %11 : vector<1x32xf32> to vector<1x32xf32>
    %13 = vector.broadcast %12 : vector<1x32xf32> to vector<8x32xf32>
    %14 = arith.addf %10, %13 : vector<8x32xf32>
    %cst_13 = arith.constant 0.000000e+00 : f32
    %15 = vector.broadcast %cst_13 : f32 to vector<8x32xf32>
    %cst_14 = arith.constant dense<0.000000e+00> : vector<8x8xf32>
    %16 = tpu.matmul %14, %1, %cst_14 {dimension_numbers = #tpu.dot_dimension_numbers<[1], [0], [0], [1], [0, 0, 1, 1], [], []>} : vector<8x32xf32>, vector<32x8xf32>, vector<8x8xf32> -> vector<8x8xf32>
    %17 = arith.addf %16, %7 : vector<8x8xf32>
    %c0_15 = arith.constant 0 : index
    %c0_16 = arith.constant 0 : index
    %18 = vector.load %arg3[%c0_15, %c0_16] : memref<8x128xf32, #tpu.memory_space<vmem>>, vector<8x128xf32>
    %cst_17 = arith.constant dense<0.000000e+00> : vector<8x128xf32>
    %19 = tpu.matmul %17, %18, %cst_17 {dimension_numbers = #tpu.dot_dimension_numbers<[1], [0], [0], [1], [0, 0, 1, 1], [], []>} : vector<8x8xf32>, vector<8x128xf32>, vector<8x128xf32> -> vector<8x128xf32>
    %cst_18 = arith.constant dense<0.000000e+00> : vector<8x128xf32>
    %20 = tpu.matmul %14, %0, %cst_18 {dimension_numbers = #tpu.dot_dimension_numbers<[1], [0], [0], [1], [0, 0, 1, 1], [], []>} : vector<8x32xf32>, vector<32x128xf32>, vector<8x128xf32> -> vector<8x128xf32>
    %21 = arith.addf %20, %4 : vector<8x128xf32>
    %22 = arith.subf %21, %19 : vector<8x128xf32>
    %23 = vector.extract_strided_slice %22 {offsets = [0, 0], sizes = [8, 96], strides = [1, 1]} : vector<8x128xf32> to vector<8x96xf32>
    %24 = arith.negf %23 : vector<8x96xf32>
    %25 = math.exp %24 : vector<8x96xf32>
    %cst_19 = arith.constant 1.000000e+00 : f32
    %26 = vector.broadcast %cst_19 : f32 to vector<8x96xf32>
    %27 = arith.addf %26, %25 : vector<8x96xf32>
    %28 = arith.divf %26, %27 : vector<8x96xf32>
    %29 = vector.extract_strided_slice %28 {offsets = [0, 0], sizes = [8, 32], strides = [1, 1]} : vector<8x96xf32> to vector<8x32xf32>
    %30 = vector.extract_strided_slice %28 {offsets = [0, 32], sizes = [8, 32], strides = [1, 1]} : vector<8x96xf32> to vector<8x32xf32>
    %31 = vector.extract_strided_slice %28 {offsets = [0, 64], sizes = [8, 32], strides = [1, 1]} : vector<8x96xf32> to vector<8x32xf32>
    %32 = vector.extract_strided_slice %22 {offsets = [0, 96], sizes = [8, 32], strides = [1, 1]} : vector<8x128xf32> to vector<8x32xf32>
    %33 = math.tanh %32 : vector<8x32xf32>
    %34 = arith.mulf %30, %15 : vector<8x32xf32>
    %35 = arith.mulf %29, %33 : vector<8x32xf32>
    %36 = arith.addf %34, %35 : vector<8x32xf32>
    %37 = math.tanh %36 : vector<8x32xf32>
    %38 = arith.mulf %31, %37 : vector<8x32xf32>
    %c0_20 = arith.constant 0 : index
    %c0_21 = arith.constant 0 : index
    %39 = vector.load %arg9[%c0_20, %c0_21] : memref<64x32xf32, #tpu.memory_space<vmem>>, vector<8x32xf32>
    tpu.vector_store %arg9[%c0_20, %c0_21], %38 {strides = array<i32>} : memref<64x32xf32, #tpu.memory_space<vmem>>, vector<8x32xf32>,
    %cst_22 = arith.constant dense<0.000000e+00> : vector<8x128xf32>
    %40 = tpu.matmul %38, %0, %cst_22 {dimension_numbers = #tpu.dot_dimension_numbers<[1], [0], [0], [1], [0, 0, 1, 1], [], []>} : vector<8x32xf32>, vector<32x128xf32>, vector<8x128xf32> -> vector<8x128xf32>
    %41 = arith.addf %40, %4 : vector<8x128xf32>
    %42 = vector.extract_strided_slice %41 {offsets = [0, 0], sizes = [8, 96], strides = [1, 1]} : vector<8x128xf32> to vector<8x96xf32>
    %43 = arith.negf %42 : vector<8x96xf32>
    %44 = math.exp %43 : vector<8x96xf32>
    %cst_23 = arith.constant 1.000000e+00 : f32
    %45 = vector.broadcast %cst_23 : f32 to vector<8x96xf32>
    %46 = arith.addf %45, %44 : vector<8x96xf32>
    %47 = arith.divf %45, %46 : vector<8x96xf32>
    %48 = vector.extract_strided_slice %47 {offsets = [0, 0], sizes = [8, 32], strides = [1, 1]} : vector<8x96xf32> to vector<8x32xf32>
    %49 = vector.extract_strided_slice %47 {offsets = [0, 32], sizes = [8, 32], strides = [1, 1]} : vector<8x96xf32> to vector<8x32xf32>
    %50 = vector.extract_strided_slice %47 {offsets = [0, 64], sizes = [8, 32], strides = [1, 1]} : vector<8x96xf32> to vector<8x32xf32>
    %51 = vector.extract_strided_slice %41 {offsets = [0, 96], sizes = [8, 32], strides = [1, 1]} : vector<8x128xf32> to vector<8x32xf32>
    %52 = math.tanh %51 : vector<8x32xf32>
    %53 = arith.mulf %49, %36 : vector<8x32xf32>
    %54 = arith.mulf %48, %52 : vector<8x32xf32>
    %55 = arith.addf %53, %54 : vector<8x32xf32>
    %56 = math.tanh %55 : vector<8x32xf32>
    %57 = arith.mulf %50, %56 : vector<8x32xf32>
    %c8 = arith.constant 8 : index
    %c0_24 = arith.constant 0 : index
    %58 = vector.load %arg9[%c8, %c0_24] : memref<64x32xf32, #tpu.memory_space<vmem>>, vector<8x32xf32>
    tpu.vector_store %arg9[%c8, %c0_24], %57 {strides = array<i32>} : memref<64x32xf32, #tpu.memory_space<vmem>>, vector<8x32xf32>,
    %cst_25 = arith.constant dense<0.000000e+00> : vector<8x128xf32>
    %59 = tpu.matmul %57, %0, %cst_25 {dimension_numbers = #tpu.dot_dimension_numbers<[1], [0], [0], [1], [0, 0, 1, 1], [], []>} : vector<8x32xf32>, vector<32x128xf32>, vector<8x128xf32> -> vector<8x128xf32>
    %60 = arith.addf %59, %4 : vector<8x128xf32>
    %61 = vector.extract_strided_slice %60 {offsets = [0, 0], sizes = [8, 96], strides = [1, 1]} : vector<8x128xf32> to vector<8x96xf32>
    %62 = arith.negf %61 : vector<8x96xf32>
    %63 = math.exp %62 : vector<8x96xf32>
    %cst_26 = arith.constant 1.000000e+00 : f32
    %64 = vector.broadcast %cst_26 : f32 to vector<8x96xf32>
    %65 = arith.addf %64, %63 : vector<8x96xf32>
    %66 = arith.divf %64, %65 : vector<8x96xf32>
    %67 = vector.extract_strided_slice %66 {offsets = [0, 0], sizes = [8, 32], strides = [1, 1]} : vector<8x96xf32> to vector<8x32xf32>
    %68 = vector.extract_strided_slice %66 {offsets = [0, 32], sizes = [8, 32], strides = [1, 1]} : vector<8x96xf32> to vector<8x32xf32>
    %69 = vector.extract_strided_slice %66 {offsets = [0, 64], sizes = [8, 32], strides = [1, 1]} : vector<8x96xf32> to vector<8x32xf32>
    %70 = vector.extract_strided_slice %60 {offsets = [0, 96], sizes = [8, 32], strides = [1, 1]} : vector<8x128xf32> to vector<8x32xf32>
    %71 = math.tanh %70 : vector<8x32xf32>
    %72 = arith.mulf %68, %55 : vector<8x32xf32>
    %73 = arith.mulf %67, %71 : vector<8x32xf32>
    %74 = arith.addf %72, %73 : vector<8x32xf32>
    %75 = math.tanh %74 : vector<8x32xf32>
    %76 = arith.mulf %69, %75 : vector<8x32xf32>
    %c16 = arith.constant 16 : index
    %c0_27 = arith.constant 0 : index
    %77 = vector.load %arg9[%c16, %c0_27] : memref<64x32xf32, #tpu.memory_space<vmem>>, vector<8x32xf32>
    tpu.vector_store %arg9[%c16, %c0_27], %76 {strides = array<i32>} : memref<64x32xf32, #tpu.memory_space<vmem>>, vector<8x32xf32>,
    %cst_28 = arith.constant dense<0.000000e+00> : vector<8x128xf32>
    %78 = tpu.matmul %76, %0, %cst_28 {dimension_numbers = #tpu.dot_dimension_numbers<[1], [0], [0], [1], [0, 0, 1, 1], [], []>} : vector<8x32xf32>, vector<32x128xf32>, vector<8x128xf32> -> vector<8x128xf32>
    %79 = arith.addf %78, %4 : vector<8x128xf32>
    %80 = vector.extract_strided_slice %79 {offsets = [0, 0], sizes = [8, 96], strides = [1, 1]} : vector<8x128xf32> to vector<8x96xf32>
    %81 = arith.negf %80 : vector<8x96xf32>
    %82 = math.exp %81 : vector<8x96xf32>
    %cst_29 = arith.constant 1.000000e+00 : f32
    %83 = vector.broadcast %cst_29 : f32 to vector<8x96xf32>
    %84 = arith.addf %83, %82 : vector<8x96xf32>
    %85 = arith.divf %83, %84 : vector<8x96xf32>
    %86 = vector.extract_strided_slice %85 {offsets = [0, 0], sizes = [8, 32], strides = [1, 1]} : vector<8x96xf32> to vector<8x32xf32>
    %87 = vector.extract_strided_slice %85 {offsets = [0, 32], sizes = [8, 32], strides = [1, 1]} : vector<8x96xf32> to vector<8x32xf32>
    %88 = vector.extract_strided_slice %85 {offsets = [0, 64], sizes = [8, 32], strides = [1, 1]} : vector<8x96xf32> to vector<8x32xf32>
    %89 = vector.extract_strided_slice %79 {offsets = [0, 96], sizes = [8, 32], strides = [1, 1]} : vector<8x128xf32> to vector<8x32xf32>
    %90 = math.tanh %89 : vector<8x32xf32>
    %91 = arith.mulf %87, %74 : vector<8x32xf32>
    %92 = arith.mulf %86, %90 : vector<8x32xf32>
    %93 = arith.addf %91, %92 : vector<8x32xf32>
    %94 = math.tanh %93 : vector<8x32xf32>
    %95 = arith.mulf %88, %94 : vector<8x32xf32>
    %c24 = arith.constant 24 : index
    %c0_30 = arith.constant 0 : index
    %96 = vector.load %arg9[%c24, %c0_30] : memref<64x32xf32, #tpu.memory_space<vmem>>, vector<8x32xf32>
    tpu.vector_store %arg9[%c24, %c0_30], %95 {strides = array<i32>} : memref<64x32xf32, #tpu.memory_space<vmem>>, vector<8x32xf32>,
    %cst_31 = arith.constant dense<0.000000e+00> : vector<8x128xf32>
    %97 = tpu.matmul %95, %0, %cst_31 {dimension_numbers = #tpu.dot_dimension_numbers<[1], [0], [0], [1], [0, 0, 1, 1], [], []>} : vector<8x32xf32>, vector<32x128xf32>, vector<8x128xf32> -> vector<8x128xf32>
    %98 = arith.addf %97, %4 : vector<8x128xf32>
    %99 = vector.extract_strided_slice %98 {offsets = [0, 0], sizes = [8, 96], strides = [1, 1]} : vector<8x128xf32> to vector<8x96xf32>
    %100 = arith.negf %99 : vector<8x96xf32>
    %101 = math.exp %100 : vector<8x96xf32>
    %cst_32 = arith.constant 1.000000e+00 : f32
    %102 = vector.broadcast %cst_32 : f32 to vector<8x96xf32>
    %103 = arith.addf %102, %101 : vector<8x96xf32>
    %104 = arith.divf %102, %103 : vector<8x96xf32>
    %105 = vector.extract_strided_slice %104 {offsets = [0, 0], sizes = [8, 32], strides = [1, 1]} : vector<8x96xf32> to vector<8x32xf32>
    %106 = vector.extract_strided_slice %104 {offsets = [0, 32], sizes = [8, 32], strides = [1, 1]} : vector<8x96xf32> to vector<8x32xf32>
    %107 = vector.extract_strided_slice %104 {offsets = [0, 64], sizes = [8, 32], strides = [1, 1]} : vector<8x96xf32> to vector<8x32xf32>
    %108 = vector.extract_strided_slice %98 {offsets = [0, 96], sizes = [8, 32], strides = [1, 1]} : vector<8x128xf32> to vector<8x32xf32>
    %109 = math.tanh %108 : vector<8x32xf32>
    %110 = arith.mulf %106, %93 : vector<8x32xf32>
    %111 = arith.mulf %105, %109 : vector<8x32xf32>
    %112 = arith.addf %110, %111 : vector<8x32xf32>
    %113 = math.tanh %112 : vector<8x32xf32>
    %114 = arith.mulf %107, %113 : vector<8x32xf32>
    %c32 = arith.constant 32 : index
    %c0_33 = arith.constant 0 : index
    %115 = vector.load %arg9[%c32, %c0_33] : memref<64x32xf32, #tpu.memory_space<vmem>>, vector<8x32xf32>
    tpu.vector_store %arg9[%c32, %c0_33], %114 {strides = array<i32>} : memref<64x32xf32, #tpu.memory_space<vmem>>, vector<8x32xf32>,
    %cst_34 = arith.constant dense<0.000000e+00> : vector<8x128xf32>
    %116 = tpu.matmul %114, %0, %cst_34 {dimension_numbers = #tpu.dot_dimension_numbers<[1], [0], [0], [1], [0, 0, 1, 1], [], []>} : vector<8x32xf32>, vector<32x128xf32>, vector<8x128xf32> -> vector<8x128xf32>
    %117 = arith.addf %116, %4 : vector<8x128xf32>
    %118 = vector.extract_strided_slice %117 {offsets = [0, 0], sizes = [8, 96], strides = [1, 1]} : vector<8x128xf32> to vector<8x96xf32>
    %119 = arith.negf %118 : vector<8x96xf32>
    %120 = math.exp %119 : vector<8x96xf32>
    %cst_35 = arith.constant 1.000000e+00 : f32
    %121 = vector.broadcast %cst_35 : f32 to vector<8x96xf32>
    %122 = arith.addf %121, %120 : vector<8x96xf32>
    %123 = arith.divf %121, %122 : vector<8x96xf32>
    %124 = vector.extract_strided_slice %123 {offsets = [0, 0], sizes = [8, 32], strides = [1, 1]} : vector<8x96xf32> to vector<8x32xf32>
    %125 = vector.extract_strided_slice %123 {offsets = [0, 32], sizes = [8, 32], strides = [1, 1]} : vector<8x96xf32> to vector<8x32xf32>
    %126 = vector.extract_strided_slice %123 {offsets = [0, 64], sizes = [8, 32], strides = [1, 1]} : vector<8x96xf32> to vector<8x32xf32>
    %127 = vector.extract_strided_slice %117 {offsets = [0, 96], sizes = [8, 32], strides = [1, 1]} : vector<8x128xf32> to vector<8x32xf32>
    %128 = math.tanh %127 : vector<8x32xf32>
    %129 = arith.mulf %125, %112 : vector<8x32xf32>
    %130 = arith.mulf %124, %128 : vector<8x32xf32>
    %131 = arith.addf %129, %130 : vector<8x32xf32>
    %132 = math.tanh %131 : vector<8x32xf32>
    %133 = arith.mulf %126, %132 : vector<8x32xf32>
    %c40 = arith.constant 40 : index
    %c0_36 = arith.constant 0 : index
    %134 = vector.load %arg9[%c40, %c0_36] : memref<64x32xf32, #tpu.memory_space<vmem>>, vector<8x32xf32>
    tpu.vector_store %arg9[%c40, %c0_36], %133 {strides = array<i32>} : memref<64x32xf32, #tpu.memory_space<vmem>>, vector<8x32xf32>,
    %cst_37 = arith.constant dense<0.000000e+00> : vector<8x128xf32>
    %135 = tpu.matmul %133, %0, %cst_37 {dimension_numbers = #tpu.dot_dimension_numbers<[1], [0], [0], [1], [0, 0, 1, 1], [], []>} : vector<8x32xf32>, vector<32x128xf32>, vector<8x128xf32> -> vector<8x128xf32>
    %136 = arith.addf %135, %4 : vector<8x128xf32>
    %137 = vector.extract_strided_slice %136 {offsets = [0, 0], sizes = [8, 96], strides = [1, 1]} : vector<8x128xf32> to vector<8x96xf32>
    %138 = arith.negf %137 : vector<8x96xf32>
    %139 = math.exp %138 : vector<8x96xf32>
    %cst_38 = arith.constant 1.000000e+00 : f32
    %140 = vector.broadcast %cst_38 : f32 to vector<8x96xf32>
    %141 = arith.addf %140, %139 : vector<8x96xf32>
    %142 = arith.divf %140, %141 : vector<8x96xf32>
    %143 = vector.extract_strided_slice %142 {offsets = [0, 0], sizes = [8, 32], strides = [1, 1]} : vector<8x96xf32> to vector<8x32xf32>
    %144 = vector.extract_strided_slice %142 {offsets = [0, 32], sizes = [8, 32], strides = [1, 1]} : vector<8x96xf32> to vector<8x32xf32>
    %145 = vector.extract_strided_slice %142 {offsets = [0, 64], sizes = [8, 32], strides = [1, 1]} : vector<8x96xf32> to vector<8x32xf32>
    %146 = vector.extract_strided_slice %136 {offsets = [0, 96], sizes = [8, 32], strides = [1, 1]} : vector<8x128xf32> to vector<8x32xf32>
    %147 = math.tanh %146 : vector<8x32xf32>
    %148 = arith.mulf %144, %131 : vector<8x32xf32>
    %149 = arith.mulf %143, %147 : vector<8x32xf32>
    %150 = arith.addf %148, %149 : vector<8x32xf32>
    %151 = math.tanh %150 : vector<8x32xf32>
    %152 = arith.mulf %145, %151 : vector<8x32xf32>
    %c48 = arith.constant 48 : index
    %c0_39 = arith.constant 0 : index
    %153 = vector.load %arg9[%c48, %c0_39] : memref<64x32xf32, #tpu.memory_space<vmem>>, vector<8x32xf32>
    tpu.vector_store %arg9[%c48, %c0_39], %152 {strides = array<i32>} : memref<64x32xf32, #tpu.memory_space<vmem>>, vector<8x32xf32>,
    %cst_40 = arith.constant dense<0.000000e+00> : vector<8x128xf32>
    %154 = tpu.matmul %152, %0, %cst_40 {dimension_numbers = #tpu.dot_dimension_numbers<[1], [0], [0], [1], [0, 0, 1, 1], [], []>} : vector<8x32xf32>, vector<32x128xf32>, vector<8x128xf32> -> vector<8x128xf32>
    %155 = arith.addf %154, %4 : vector<8x128xf32>
    %156 = vector.extract_strided_slice %155 {offsets = [0, 0], sizes = [8, 96], strides = [1, 1]} : vector<8x128xf32> to vector<8x96xf32>
    %157 = arith.negf %156 : vector<8x96xf32>
    %158 = math.exp %157 : vector<8x96xf32>
    %cst_41 = arith.constant 1.000000e+00 : f32
    %159 = vector.broadcast %cst_41 : f32 to vector<8x96xf32>
    %160 = arith.addf %159, %158 : vector<8x96xf32>
    %161 = arith.divf %159, %160 : vector<8x96xf32>
    %162 = vector.extract_strided_slice %161 {offsets = [0, 0], sizes = [8, 32], strides = [1, 1]} : vector<8x96xf32> to vector<8x32xf32>
    %163 = vector.extract_strided_slice %161 {offsets = [0, 32], sizes = [8, 32], strides = [1, 1]} : vector<8x96xf32> to vector<8x32xf32>
    %164 = vector.extract_strided_slice %161 {offsets = [0, 64], sizes = [8, 32], strides = [1, 1]} : vector<8x96xf32> to vector<8x32xf32>
    %165 = vector.extract_strided_slice %155 {offsets = [0, 96], sizes = [8, 32], strides = [1, 1]} : vector<8x128xf32> to vector<8x32xf32>
    %166 = math.tanh %165 : vector<8x32xf32>
    %167 = arith.mulf %163, %150 : vector<8x32xf32>
    %168 = arith.mulf %162, %166 : vector<8x32xf32>
    %169 = arith.addf %167, %168 : vector<8x32xf32>
    %170 = math.tanh %169 : vector<8x32xf32>
    %171 = arith.mulf %164, %170 : vector<8x32xf32>
    %c56 = arith.constant 56 : index
    %c0_42 = arith.constant 0 : index
    %172 = vector.load %arg9[%c56, %c0_42] : memref<64x32xf32, #tpu.memory_space<vmem>>, vector<8x32xf32>
    tpu.vector_store %arg9[%c56, %c0_42], %171 {strides = array<i32>} : memref<64x32xf32, #tpu.memory_space<vmem>>, vector<8x32xf32>,
    %c0_43 = arith.constant 0 : index
    %c0_44 = arith.constant 0 : index
    %173 = vector.load %arg9[%c0_43, %c0_44] : memref<64x32xf32, #tpu.memory_space<vmem>>, vector<64x32xf32>
    %cst_45 = arith.constant dense<0.000000e+00> : vector<64x8xf32>
    %174 = tpu.matmul %173, %1, %cst_45 {dimension_numbers = #tpu.dot_dimension_numbers<[1], [0], [0], [1], [0, 0, 1, 1], [], []>} : vector<64x32xf32>, vector<32x8xf32>, vector<64x8xf32> -> vector<64x8xf32>
    %c0_46 = arith.constant 0 : index
    %c0_47 = arith.constant 0 : index
    %175 = vector.load %arg7[%c0_46, %c0_47] : memref<1x8xf32, #tpu.memory_space<vmem>>, vector<1x8xf32>
    %176 = vector.shape_cast %175 : vector<1x8xf32> to vector<1x8xf32>
    %177 = vector.broadcast %176 : vector<1x8xf32> to vector<64x8xf32>
    %178 = arith.addf %174, %177 : vector<64x8xf32>
    %c0_48 = arith.constant 0 : index
    %c0_49 = arith.constant 0 : index
    %179 = vector.load %arg8[%c0_48, %c0_49] : memref<64x8xf32, #tpu.memory_space<vmem>>, vector<64x8xf32>
    tpu.vector_store %arg8[%c0_48, %c0_49], %178 {strides = array<i32>} : memref<64x8xf32, #tpu.memory_space<vmem>>, vector<64x8xf32>,
    return
  }
}

</mosaic_0001>

<llo_original>
// kernel: tpu_custom_call.1
$region0: #{tpu_custom_call.1}
  #allocation0 [shape = 'u32[]', space=smem, size = 0x4, offset = 0x4, fixed_abs, tag = 'smem constant byte address 0x4 - core index']
  #allocation1 [shape = 'u32[144,128]{1,0:T(1,128)}', space=vmem, size = 0x12000, scoped, tag = 'internal scratch']
  #allocation2 [shape = 'f32[64,32]{1,0:T(8,128)}', space=vmem, size = 0x8000, scoped, tag = 'scratch operand']
  %s0 = inlined_call_operand.vmem [shape: f32[8,16], index: 0, kind: input, shape index: {}]
  %s1 = inlined_call_operand.hbm [shape: f32[16,32], index: 1, kind: input, shape index: {}]
  %s2 = inlined_call_operand.vmem [shape: f32[1,32], index: 2, kind: input, shape index: {}]
  %s3 = inlined_call_operand.hbm [shape: f32[8,128], index: 3, kind: input, shape index: {}]
  %s4 = inlined_call_operand.vmem [shape: f32[32,128], index: 4, kind: input, shape index: {}]
  %s5 = inlined_call_operand.vmem [shape: f32[1,128], index: 5, kind: input, shape index: {}]
  %s6 = inlined_call_operand.vmem [shape: f32[32,8], index: 6, kind: input, shape index: {}]
  %s7 = inlined_call_operand.vmem [shape: f32[1,8], index: 7, kind: input, shape index: {}]
  %s8 = inlined_call_operand.vmem [shape: f32[64,8], index: 8, kind: output, shape index: {}]
  %s9 = sld [smem:[#allocation0]]
  $region50: #{tpu_custom_call.1} parent=0
    _
  %s11 = ssub.s32 1, %s9
  %s12 = scalar_select 0, %s11, %s9
  $region1: #{tpu_custom_call.1} parent=0
    #allocation3 [shape = 'u8[8192]{0}', space=vmem, size = 0x2000, scoped, tag = 'input window, operand 1, single buffered']
    #allocation4 [shape = 's32[1]{0}', space=sflag, size = 0x4, scoped, tag = 'scoped memory for tpu_custom_call.1']
    #allocation5 [shape = 'u8[4096]{0}', space=vmem, size = 0x1000, scoped, tag = 'input window, operand 3, single buffered']
    #allocation6 [shape = 's32[1]{0}', space=sflag, size = 0x4, scoped, tag = 'scoped memory for tpu_custom_call.1']
    %13 = vsyncpa [#allocation4], 0
    %14 = vsyncpa [#allocation6], 0
    // Predicated region
    $region2: #{tpu_custom_call.1} parent=1 // pred_check
      _
    $region3: #{tpu_custom_call.1} parent=1 // pred_check_branch
      %16 = sbr.rel (0) target = $region5
    $region4: #{tpu_custom_call.1} parent=1 // pred_region
      _
    $region5: #{tpu_custom_call.1} parent=1 // pred_fallthru
      _
    // Predicated region
    $region6: #{tpu_custom_call.1} parent=1 // pred_check
      _
    $region7: #{tpu_custom_call.1} parent=1 // pred_check_branch
      %18 = sbr.rel (0) target = $region9
    $region8: #{tpu_custom_call.1} parent=1 // pred_region
      %s20 = ssub.s32 256, 256
      %21 = vsyncadd [#allocation4], %s20
      %s22 = sshll.u32 [#allocation3], 4
      %s23 = int_to_ptr.vmem [resolvable:$true] %s22
      %28 = dma.hbm_to_vmem [thread:$0]  %s1, 256, %s23, [#allocation4], 128, 128, 8
    $region9: #{tpu_custom_call.1} parent=1 // pred_fallthru
      _
    // Predicated region
    $region10: #{tpu_custom_call.1} parent=1 // pred_check
      _
    $region11: #{tpu_custom_call.1} parent=1 // pred_check_branch
      %30 = sbr.rel (0) target = $region13
    $region12: #{tpu_custom_call.1} parent=1 // pred_region
      _
    $region13: #{tpu_custom_call.1} parent=1 // pred_fallthru
      _
    // Predicated region
    $region14: #{tpu_custom_call.1} parent=1 // pred_check
      _
    $region15: #{tpu_custom_call.1} parent=1 // pred_check_branch
      %32 = sbr.rel (0) target = $region17
    $region16: #{tpu_custom_call.1} parent=1 // pred_region
      %s34 = ssub.s32 128, 128
      %35 = vsyncadd [#allocation6], %s34
      %s37 = sshll.u32 [#allocation5], 4
      %s38 = int_to_ptr.vmem [resolvable:$true] %s37
      %40 = dma.hbm_to_vmem [thread:$0]  %s3, 128, %s38, [#allocation6]
    $region17: #{tpu_custom_call.1} parent=1 // pred_fallthru
      _
    // Predicated region
    $region18: #{tpu_custom_call.1} parent=1 // pred_check
      _
    $region19: #{tpu_custom_call.1} parent=1 // pred_check_branch
      %42 = sbr.rel (0) target = $region21
    $region20: #{tpu_custom_call.1} parent=1 // pred_region
      _
    $region21: #{tpu_custom_call.1} parent=1 // pred_fallthru
      _
    // Predicated region
    $region22: #{tpu_custom_call.1} parent=1 // pred_check
      _
    $region23: #{tpu_custom_call.1} parent=1 // pred_check_branch
      %44 = sbr.rel (0) target = $region25
    $region24: #{tpu_custom_call.1} parent=1 // pred_region
      _
    $region25: #{tpu_custom_call.1} parent=1 // pred_fallthru
      _
    // Predicated region
    $region26: #{tpu_custom_call.1} parent=1 // pred_check
      _
    $region27: #{tpu_custom_call.1} parent=1 // pred_check_branch
      %46 = sbr.rel (0) target = $region29
    $region28: #{tpu_custom_call.1} parent=1 // pred_region
      _
    $region29: #{tpu_custom_call.1} parent=1 // pred_fallthru
      _
    // Predicated region
    $region30: #{tpu_custom_call.1} parent=1 // pred_check
      _
    $region31: #{tpu_custom_call.1} parent=1 // pred_check_branch
      %48 = sbr.rel (0) target = $region33
    $region32: #{tpu_custom_call.1} parent=1 // pred_region
      _
    $region33: #{tpu_custom_call.1} parent=1 // pred_fallthru
      _
    // Predicated region
    $region34: #{tpu_custom_call.1} parent=1 // pred_check
      _
    $region35: #{tpu_custom_call.1} parent=1 // pred_check_branch
      %50 = sbr.rel (0) target = $region37
    $region36: #{tpu_custom_call.1} parent=1 // pred_region
      %51 = dma.done [#allocation4], 256
    $region37: #{tpu_custom_call.1} parent=1 // pred_fallthru
      _
    // Predicated region
    $region38: #{tpu_custom_call.1} parent=1 // pred_check
      _
    $region39: #{tpu_custom_call.1} parent=1 // pred_check_branch
      %53 = sbr.rel (0) target = $region41
    $region40: #{tpu_custom_call.1} parent=1 // pred_region
      %54 = dma.done [#allocation6], 128
    $region41: #{tpu_custom_call.1} parent=1 // pred_fallthru
      _
    %v55 = vld [vmem:[%s4] sm:$0xff]
    %v56 = vld [vmem:[%s4 + $0x8] sm:$0xff]
    %v57 = vld [vmem:[%s4 + $0x10] sm:$0xff]
    %v58 = vld [vmem:[%s4 + $0x18] sm:$0xff]
    %v59 = vld [vmem:[%s6] sm:$0xff]
    %v60 = vld [vmem:[%s6 + $0x8] sm:$0xff]
    %v61 = vld [vmem:[%s6 + $0x10] sm:$0xff]
    %v62 = vld [vmem:[%s6 + $0x18] sm:$0xff]
    %v63 = vld [vmem:[%s5] sm:$0x1]
    %v65 = vlaneseq
    %v66 = vshrl.u32 %v65, 7
    %v67 = vsub.s32 0, %v66
    %v68 = vrot.slane %v63, %v67
    %v70 = vld [vmem:[%s7] sm:$0x1]
    %v72 = vlaneseq
    %v73 = vshrl.u32 %v72, 7
    %v74 = vsub.s32 0, %v73
    %v75 = vrot.slane %v70, %v74
    %v77 = vld [vmem:[%s0] sm:$0xff]
    %v78 = vld [vmem:[#allocation3] sm:$0xff]
    %v79 = vld [vmem:[#allocation3 + $0x8] sm:$0xff]
    %v80 = vld [vmem:[%s2] sm:$0x1]
    %v82 = vlaneseq
    %v83 = vshrl.u32 %v82, 7
    %v84 = vsub.s32 0, %v83
    %v85 = vrot.slane %v80, %v84
    %vm87 = vcmask 130048
    %v89 = vsel %vm87, %v77, 0
    %91 = vmatprep.subr.mxu0 0.0
    %92 = vmatpush1.msra.mxu0 0.0
    %93 = vmatprep.subr.mxu0 0.0
    %94 = vmatpush1.msra.mxu0 0.0
    %95 = vmatprep.subr.mxu0 0.0
    %96 = vmatpush1.msra.mxu0 0.0
    %97 = vmatprep.subr.mxu0 0.0
    %98 = vmatpush1.msra.mxu0 0.0
    %99 = vmatprep.subr.mxu0 0.0
    %100 = vmatpush1.msra.mxu0 0.0
    %101 = vmatprep.subr.mxu0 0.0
    %102 = vmatpush1.msra.mxu0 0.0
    %103 = vmatprep.subr.mxu0 0.0
    %104 = vmatpush1.msra.mxu0 0.0
    %105 = vmatprep.subr.mxu0 0.0
    %106 = vmatpush1.msra.mxu0 0.0
    %107 = vmatprep.subr.mxu0 0.0
    %108 = vmatpush1.msra.mxu0 0.0
    %109 = vmatprep.subr.mxu0 0.0
    %110 = vmatpush1.msra.mxu0 0.0
    %111 = vmatprep.subr.mxu0 0.0
    %112 = vmatpush1.msra.mxu0 0.0
    %113 = vmatprep.subr.mxu0 0.0
    %114 = vmatpush1.msra.mxu0 0.0
    %115 = vmatprep.subr.mxu0 0.0
    %116 = vmatpush1.msra.mxu0 0.0
    %117 = vmatprep.subr.mxu0 0.0
    %118 = vmatpush1.msra.mxu0 0.0
    %119 = vmatprep.subr.mxu0 0.0
    %120 = vmatpush1.msra.mxu0 %v79
    %121 = vmatprep.subr.mxu0 0.0
    %122 = vmatpush1.msra.mxu0 %v78
    %123 = vmatprep.subr.mxu0 0.0
    %124 = vmatpush2.msra.mxu0 0.0
    %125 = vmatprep.subr.mxu0 0.0
    %126 = vmatpush2.msra.mxu0 0.0
    %127 = vmatprep.subr.mxu0 0.0
    %128 = vmatpush2.msra.mxu0 0.0
    %129 = vmatprep.subr.mxu0 0.0
    %130 = vmatpush2.msra.mxu0 0.0
    %131 = vmatprep.subr.mxu0 0.0
    %132 = vmatpush2.msra.mxu0 0.0
    %133 = vmatprep.subr.mxu0 0.0
    %134 = vmatpush2.msra.mxu0 0.0
    %135 = vmatprep.subr.mxu0 0.0
    %136 = vmatpush2.msra.mxu0 0.0
    %137 = vmatprep.subr.mxu0 0.0
    %138 = vmatpush2.msra.mxu0 0.0
    %139 = vmatprep.subr.mxu0 0.0
    %140 = vmatpush2.msra.mxu0 0.0
    %141 = vmatprep.subr.mxu0 0.0
    %142 = vmatpush2.msra.mxu0 0.0
    %143 = vmatprep.subr.mxu0 0.0
    %144 = vmatpush2.msra.mxu0 0.0
    %145 = vmatprep.subr.mxu0 0.0
    %146 = vmatpush2.msra.mxu0 0.0
    %147 = vmatprep.subr.mxu0 0.0
    %148 = vmatpush2.msra.mxu0 0.0
    %149 = vmatprep.subr.mxu0 0.0
    %150 = vmatpush2.msra.mxu0 0.0
    %151 = vmatprep.subr.mxu0 0.0
    %152 = vmatpush2.msra.mxu0 0.0
    %153 = vmatprep.subr.mxu0 0.0
    %154 = vmatpush2.msra.mxu0 0.0
    %155 = vmatprep.mubr.f32.mxu0 0.0
    %156 = vmatmul.mubr.f32.gmra.mxu0 %v89
    %v157 = vpop.f32.mrf.mxu0
    %v158 = vadd.f32 %v85, %v157
    %v159 = vpop.f32.mrf.mxu0
    %160 = vdwg.mxu0
    %vm161 = vcmask 261120
    %v163 = vsel %vm161, %v158, 0
    %165 = vmatprep.subr.mxu0 0.0
    %166 = vmatpush1.msra.mxu0 0.0
    %167 = vmatprep.subr.mxu0 0.0
    %168 = vmatpush1.msra.mxu0 0.0
    %169 = vmatprep.subr.mxu0 0.0
    %170 = vmatpush1.msra.mxu0 0.0
    %171 = vmatprep.subr.mxu0 0.0
    %172 = vmatpush1.msra.mxu0 0.0
    %173 = vmatprep.subr.mxu0 0.0
    %174 = vmatpush1.msra.mxu0 0.0
    %175 = vmatprep.subr.mxu0 0.0
    %176 = vmatpush1.msra.mxu0 0.0
    %177 = vmatprep.subr.mxu0 0.0
    %178 = vmatpush1.msra.mxu0 0.0
    %179 = vmatprep.subr.mxu0 0.0
    %180 = vmatpush1.msra.mxu0 0.0
    %181 = vmatprep.subr.mxu0 0.0
    %182 = vmatpush1.msra.mxu0 0.0
    %183 = vmatprep.subr.mxu0 0.0
    %184 = vmatpush1.msra.mxu0 0.0
    %185 = vmatprep.subr.mxu0 0.0
    %186 = vmatpush1.msra.mxu0 0.0
    %187 = vmatprep.subr.mxu0 0.0
    %188 = vmatpush1.msra.mxu0 0.0
    %189 = vmatprep.subr.mxu0 0.0
    %190 = vmatpush1.msra.mxu0 %v62
    %191 = vmatprep.subr.mxu0 0.0
    %192 = vmatpush1.msra.mxu0 %v61
    %193 = vmatprep.subr.mxu0 0.0
    %194 = vmatpush1.msra.mxu0 %v60
    %195 = vmatprep.subr.mxu0 0.0
    %196 = vmatpush1.msra.mxu0 %v59
    %197 = vmatprep.subr.mxu0 0.0
    %198 = vmatpush2.msra.mxu0 0.0
    %199 = vmatprep.subr.mxu0 0.0
    %200 = vmatpush2.msra.mxu0 0.0
    %201 = vmatprep.subr.mxu0 0.0
    %202 = vmatpush2.msra.mxu0 0.0
    %203 = vmatprep.subr.mxu0 0.0
    %204 = vmatpush2.msra.mxu0 0.0
    %205 = vmatprep.subr.mxu0 0.0
    %206 = vmatpush2.msra.mxu0 0.0
    %207 = vmatprep.subr.mxu0 0.0
    %208 = vmatpush2.msra.mxu0 0.0
    %209 = vmatprep.subr.mxu0 0.0
    %210 = vmatpush2.msra.mxu0 0.0
    %211 = vmatprep.subr.mxu0 0.0
    %212 = vmatpush2.msra.mxu0 0.0
    %213 = vmatprep.subr.mxu0 0.0
    %214 = vmatpush2.msra.mxu0 0.0
    %215 = vmatprep.subr.mxu0 0.0
    %216 = vmatpush2.msra.mxu0 0.0
    %217 = vmatprep.subr.mxu0 0.0
    %218 = vmatpush2.msra.mxu0 0.0
    %219 = vmatprep.subr.mxu0 0.0
    %220 = vmatpush2.msra.mxu0 0.0
    %221 = vmatprep.subr.mxu0 0.0
    %222 = vmatpush2.msra.mxu0 0.0
    %223 = vmatprep.subr.mxu0 0.0
    %224 = vmatpush2.msra.mxu0 0.0
    %225 = vmatprep.subr.mxu0 0.0
    %226 = vmatpush2.msra.mxu0 0.0
    %227 = vmatprep.subr.mxu0 0.0
    %228 = vmatpush2.msra.mxu0 0.0
    %229 = vmatprep.mubr.f32.mxu0 0.0
    %230 = vmatmul.mubr.f32.gmra.mxu0 %v163
    %v231 = vpop.f32.mrf.mxu0
    %v232 = vadd.f32 %v75, %v231
    %v233 = vpop.f32.mrf.mxu0
    %234 = vdwg.mxu0
    %v235 = vld [vmem:[#allocation5] sm:$0xff]
    %vm236 = vcmask 64512
    %v238 = vsel %vm236, %v232, 0
    %240 = vmatprep.subr.mxu0 0.0
    %241 = vmatpush1.msra.mxu0 0.0
    %242 = vmatprep.subr.mxu0 0.0
    %243 = vmatpush1.msra.mxu0 0.0
    %244 = vmatprep.subr.mxu0 0.0
    %245 = vmatpush1.msra.mxu0 0.0
    %246 = vmatprep.subr.mxu0 0.0
    %247 = vmatpush1.msra.mxu0 0.0
    %248 = vmatprep.subr.mxu0 0.0
    %249 = vmatpush1.msra.mxu0 0.0
    %250 = vmatprep.subr.mxu0 0.0
    %251 = vmatpush1.msra.mxu0 0.0
    %252 = vmatprep.subr.mxu0 0.0
    %253 = vmatpush1.msra.mxu0 0.0
    %254 = vmatprep.subr.mxu0 0.0
    %255 = vmatpush1.msra.mxu0 0.0
    %256 = vmatprep.subr.mxu0 0.0
    %257 = vmatpush1.msra.mxu0 0.0
    %258 = vmatprep.subr.mxu0 0.0
    %259 = vmatpush1.msra.mxu0 0.0
    %260 = vmatprep.subr.mxu0 0.0
    %261 = vmatpush1.msra.mxu0 0.0
    %262 = vmatprep.subr.mxu0 0.0
    %263 = vmatpush1.msra.mxu0 0.0
    %264 = vmatprep.subr.mxu0 0.0
    %265 = vmatpush1.msra.mxu0 0.0
    %266 = vmatprep.subr.mxu0 0.0
    %267 = vmatpush1.msra.mxu0 0.0
    %268 = vmatprep.subr.mxu0 0.0
    %269 = vmatpush1.msra.mxu0 0.0
    %270 = vmatprep.subr.mxu0 0.0
    %271 = vmatpush1.msra.mxu0 %v235
    %272 = vmatprep.subr.mxu0 0.0
    %273 = vmatpush2.msra.mxu0 0.0
    %274 = vmatprep.subr.mxu0 0.0
    %275 = vmatpush2.msra.mxu0 0.0
    %276 = vmatprep.subr.mxu0 0.0
    %277 = vmatpush2.msra.mxu0 0.0
    %278 = vmatprep.subr.mxu0 0.0
    %279 = vmatpush2.msra.mxu0 0.0
    %280 = vmatprep.subr.mxu0 0.0
    %281 = vmatpush2.msra.mxu0 0.0
    %282 = vmatprep.subr.mxu0 0.0
    %283 = vmatpush2.msra.mxu0 0.0
    %284 = vmatprep.subr.mxu0 0.0
    %285 = vmatpush2.msra.mxu0 0.0
    %286 = vmatprep.subr.mxu0 0.0
    %287 = vmatpush2.msra.mxu0 0.0
    %288 = vmatprep.subr.mxu0 0.0
    %289 = vmatpush2.msra.mxu0 0.0
    %290 = vmatprep.subr.mxu0 0.0
    %291 = vmatpush2.msra.mxu0 0.0
    %292 = vmatprep.subr.mxu0 0.0
    %293 = vmatpush2.msra.mxu0 0.0
    %294 = vmatprep.subr.mxu0 0.0
    %295 = vmatpush2.msra.mxu0 0.0
    %296 = vmatprep.subr.mxu0 0.0
    %297 = vmatpush2.msra.mxu0 0.0
    %298 = vmatprep.subr.mxu0 0.0
    %299 = vmatpush2.msra.mxu0 0.0
    %300 = vmatprep.subr.mxu0 0.0
    %301 = vmatpush2.msra.mxu0 0.0
    %302 = vmatprep.subr.mxu0 0.0
    %303 = vmatpush2.msra.mxu0 0.0
    %304 = vmatprep.mubr.f32.mxu0 0.0
    %305 = vmatmul.mubr.f32.gmra.mxu0 %v238
    %v306 = vpop.f32.mrf.mxu0
    %v307 = vadd.f32 0.0, %v306
    %v308 = vpop.f32.mrf.mxu0
    %309 = vdwg.mxu0
    %310 = vmatprep.subr.mxu0 0.0
    %311 = vmatpush1.msra.mxu0 0.0
    %312 = vmatprep.subr.mxu0 0.0
    %313 = vmatpush1.msra.mxu0 0.0
    %314 = vmatprep.subr.mxu0 0.0
    %315 = vmatpush1.msra.mxu0 0.0
    %316 = vmatprep.subr.mxu0 0.0
    %317 = vmatpush1.msra.mxu0 0.0
    %318 = vmatprep.subr.mxu0 0.0
    %319 = vmatpush1.msra.mxu0 0.0
    %320 = vmatprep.subr.mxu0 0.0
    %321 = vmatpush1.msra.mxu0 0.0
    %322 = vmatprep.subr.mxu0 0.0
    %323 = vmatpush1.msra.mxu0 0.0
    %324 = vmatprep.subr.mxu0 0.0
    %325 = vmatpush1.msra.mxu0 0.0
    %326 = vmatprep.subr.mxu0 0.0
    %327 = vmatpush1.msra.mxu0 0.0
    %328 = vmatprep.subr.mxu0 0.0
    %329 = vmatpush1.msra.mxu0 0.0
    %330 = vmatprep.subr.mxu0 0.0
    %331 = vmatpush1.msra.mxu0 0.0
    %332 = vmatprep.subr.mxu0 0.0
    %333 = vmatpush1.msra.mxu0 0.0
    %334 = vmatprep.subr.mxu0 0.0
    %335 = vmatpush1.msra.mxu0 %v58
    %336 = vmatprep.subr.mxu0 0.0
    %337 = vmatpush1.msra.mxu0 %v57
    %338 = vmatprep.subr.mxu0 0.0
    %339 = vmatpush1.msra.mxu0 %v56
    %340 = vmatprep.subr.mxu0 0.0
    %341 = vmatpush1.msra.mxu0 %v55
    %342 = vmatprep.subr.mxu0 0.0
    %343 = vmatpush2.msra.mxu0 0.0
    %344 = vmatprep.subr.mxu0 0.0
    %345 = vmatpush2.msra.mxu0 0.0
    %346 = vmatprep.subr.mxu0 0.0
    %347 = vmatpush2.msra.mxu0 0.0
    %348 = vmatprep.subr.mxu0 0.0
    %349 = vmatpush2.msra.mxu0 0.0
    %350 = vmatprep.subr.mxu0 0.0
    %351 = vmatpush2.msra.mxu0 0.0
    %352 = vmatprep.subr.mxu0 0.0
    %353 = vmatpush2.msra.mxu0 0.0
    %354 = vmatprep.subr.mxu0 0.0
    %355 = vmatpush2.msra.mxu0 0.0
    %356 = vmatprep.subr.mxu0 0.0
    %357 = vmatpush2.msra.mxu0 0.0
    %358 = vmatprep.subr.mxu0 0.0
    %359 = vmatpush2.msra.mxu0 0.0
    %360 = vmatprep.subr.mxu0 0.0
    %361 = vmatpush2.msra.mxu0 0.0
    %362 = vmatprep.subr.mxu0 0.0
    %363 = vmatpush2.msra.mxu0 0.0
    %364 = vmatprep.subr.mxu0 0.0
    %365 = vmatpush2.msra.mxu0 0.0
    %366 = vmatprep.subr.mxu0 0.0
    %367 = vmatpush2.msra.mxu0 0.0
    %368 = vmatprep.subr.mxu0 0.0
    %369 = vmatpush2.msra.mxu0 0.0
    %370 = vmatprep.subr.mxu0 0.0
    %371 = vmatpush2.msra.mxu0 0.0
    %372 = vmatprep.subr.mxu0 0.0
    %373 = vmatpush2.msra.mxu0 0.0
    %374 = vmatprep.mubr.f32.mxu0 0.0
    %375 = vmatmul.mubr.f32.gmra.mxu0 %v163
    %v376 = vpop.f32.mrf.mxu0
    %v377 = vadd.f32 %v68, %v376
    %v378 = vpop.f32.mrf.mxu0
    %379 = vdwg.mxu0
    %v380 = vsub.f32 %v377, %v307
    %v381 = vxor.u32 %v380, 2147483648
    %v382 = vmul.f32 %v381, 1.442695
    %v383 = vpow.pop %v382
    %v384 = vadd.f32 %v383, 1.0
    %v385 = vrcp.pop %v384
    %v386 = vmul.f32 1.0, %v385
    %v387 = vtanh.pop %v380
    %v388 = vmul.f32 %v386, 0.0
    %390 = vrot.lane.b32.xlu0 %v387, 32
    %v391 = vpop.permute.xlu0 %390
    %v393 = vmul.f32 %v386, %v391
    %395 = vrot.lane.b32.xlu0 %v393, 32
    %v396 = vpop.permute.xlu0 %395
    %v398 = vadd.f32 %v388, %v396
    %v399 = vtanh.pop %v398
    %401 = vrot.lane.b32.xlu0 %v399, 32
    %v402 = vpop.permute.xlu0 %401
    %v404 = vmul.f32 %v386, %v402
    %406 = vrot.lane.b32.xlu0 %v404, 64
    %v407 = vpop.permute.xlu0 %406
    %409 = vst.msk [vmem:[#allocation2] sm:$0xff] %vm161, %v407
    %v410 = vsel %vm161, %v407, 0
    %412 = vmatprep.subr.mxu0 0.0
    %413 = vmatpush1.msra.mxu0 0.0
    %414 = vmatprep.subr.mxu0 0.0
    %415 = vmatpush1.msra.mxu0 0.0
    %416 = vmatprep.subr.mxu0 0.0
    %417 = vmatpush1.msra.mxu0 0.0
    %418 = vmatprep.subr.mxu0 0.0
    %419 = vmatpush1.msra.mxu0 0.0
    %420 = vmatprep.subr.mxu0 0.0
    %421 = vmatpush1.msra.mxu0 0.0
    %422 = vmatprep.subr.mxu0 0.0
    %423 = vmatpush1.msra.mxu0 0.0
    %424 = vmatprep.subr.mxu0 0.0
    %425 = vmatpush1.msra.mxu0 0.0
    %426 = vmatprep.subr.mxu0 0.0
    %427 = vmatpush1.msra.mxu0 0.0
    %428 = vmatprep.subr.mxu0 0.0
    %429 = vmatpush1.msra.mxu0 0.0
    %430 = vmatprep.subr.mxu0 0.0
    %431 = vmatpush1.msra.mxu0 0.0
    %432 = vmatprep.subr.mxu0 0.0
    %433 = vmatpush1.msra.mxu0 0.0
    %434 = vmatprep.subr.mxu0 0.0
    %435 = vmatpush1.msra.mxu0 0.0
    %436 = vmatprep.subr.mxu0 0.0
    %437 = vmatpush1.msra.mxu0 %v58
    %438 = vmatprep.subr.mxu0 0.0
    %439 = vmatpush1.msra.mxu0 %v57
    %440 = vmatprep.subr.mxu0 0.0
    %441 = vmatpush1.msra.mxu0 %v56
    %442 = vmatprep.subr.mxu0 0.0
    %443 = vmatpush1.msra.mxu0 %v55
    %444 = vmatprep.subr.mxu0 0.0
    %445 = vmatpush2.msra.mxu0 0.0
    %446 = vmatprep.subr.mxu0 0.0
    %447 = vmatpush2.msra.mxu0 0.0
    %448 = vmatprep.subr.mxu0 0.0
    %449 = vmatpush2.msra.mxu0 0.0
    %450 = vmatprep.subr.mxu0 0.0
    %451 = vmatpush2.msra.mxu0 0.0
    %452 = vmatprep.subr.mxu0 0.0
    %453 = vmatpush2.msra.mxu0 0.0
    %454 = vmatprep.subr.mxu0 0.0
    %455 = vmatpush2.msra.mxu0 0.0
    %456 = vmatprep.subr.mxu0 0.0
    %457 = vmatpush2.msra.mxu0 0.0
    %458 = vmatprep.subr.mxu0 0.0
    %459 = vmatpush2.msra.mxu0 0.0
    %460 = vmatprep.subr.mxu0 0.0
    %461 = vmatpush2.msra.mxu0 0.0
    %462 = vmatprep.subr.mxu0 0.0
    %463 = vmatpush2.msra.mxu0 0.0
    %464 = vmatprep.subr.mxu0 0.0
    %465 = vmatpush2.msra.mxu0 0.0
    %466 = vmatprep.subr.mxu0 0.0
    %467 = vmatpush2.msra.mxu0 0.0
    %468 = vmatprep.subr.mxu0 0.0
    %469 = vmatpush2.msra.mxu0 0.0
    %470 = vmatprep.subr.mxu0 0.0
    %471 = vmatpush2.msra.mxu0 0.0
    %472 = vmatprep.subr.mxu0 0.0
    %473 = vmatpush2.msra.mxu0 0.0
    %474 = vmatprep.subr.mxu0 0.0
    %475 = vmatpush2.msra.mxu0 0.0
    %476 = vmatprep.mubr.f32.mxu0 0.0
    %477 = vmatmul.mubr.f32.gmra.mxu0 %v410
    %v478 = vpop.f32.mrf.mxu0
    %v479 = vadd.f32 %v68, %v478
    %v480 = vpop.f32.mrf.mxu0
    %481 = vdwg.mxu0
    %v482 = vxor.u32 %v479, 2147483648
    %v483 = vmul.f32 %v482, 1.442695
    %v484 = vpow.pop %v483
    %v485 = vadd.f32 %v484, 1.0
    %v486 = vrcp.pop %v485
    %v487 = vmul.f32 1.0, %v486
    %v488 = vtanh.pop %v479
    %v489 = vmul.f32 %v487, %v398
    %491 = vrot.lane.b32.xlu0 %v488, 32
    %v492 = vpop.permute.xlu0 %491
    %v494 = vmul.f32 %v487, %v492
    %496 = vrot.lane.b32.xlu0 %v494, 32
    %v497 = vpop.permute.xlu0 %496
    %v499 = vadd.f32 %v489, %v497
    %v500 = vtanh.pop %v499
    %502 = vrot.lane.b32.xlu0 %v500, 32
    %v503 = vpop.permute.xlu0 %502
    %v505 = vmul.f32 %v487, %v503
    %507 = vrot.lane.b32.xlu0 %v505, 64
    %v508 = vpop.permute.xlu0 %507
    %510 = vst.msk [vmem:[#allocation2 + $0x8] sm:$0xff] %vm161, %v508
    %v511 = vsel %vm161, %v508, 0
    %513 = vmatprep.subr.mxu0 0.0
    %514 = vmatpush1.msra.mxu0 0.0
    %515 = vmatprep.subr.mxu0 0.0
    %516 = vmatpush1.msra.mxu0 0.0
    %517 = vmatprep.subr.mxu0 0.0
    %518 = vmatpush1.msra.mxu0 0.0
    %519 = vmatprep.subr.mxu0 0.0
    %520 = vmatpush1.msra.mxu0 0.0
    %521 = vmatprep.subr.mxu0 0.0
    %522 = vmatpush1.msra.mxu0 0.0
    %523 = vmatprep.subr.mxu0 0.0
    %524 = vmatpush1.msra.mxu0 0.0
    %525 = vmatprep.subr.mxu0 0.0
    %526 = vmatpush1.msra.mxu0 0.0
    %527 = vmatprep.subr.mxu0 0.0
    %528 = vmatpush1.msra.mxu0 0.0
    %529 = vmatprep.subr.mxu0 0.0
    %530 = vmatpush1.msra.mxu0 0.0
    %531 = vmatprep.subr.mxu0 0.0
    %532 = vmatpush1.msra.mxu0 0.0
    %533 = vmatprep.subr.mxu0 0.0
    %534 = vmatpush1.msra.mxu0 0.0
    %535 = vmatprep.subr.mxu0 0.0
    %536 = vmatpush1.msra.mxu0 0.0
    %537 = vmatprep.subr.mxu0 0.0
    %538 = vmatpush1.msra.mxu0 %v58
    %539 = vmatprep.subr.mxu0 0.0
    %540 = vmatpush1.msra.mxu0 %v57
    %541 = vmatprep.subr.mxu0 0.0
    %542 = vmatpush1.msra.mxu0 %v56
    %543 = vmatprep.subr.mxu0 0.0
    %544 = vmatpush1.msra.mxu0 %v55
    %545 = vmatprep.subr.mxu0 0.0
    %546 = vmatpush2.msra.mxu0 0.0
    %547 = vmatprep.subr.mxu0 0.0
    %548 = vmatpush2.msra.mxu0 0.0
    %549 = vmatprep.subr.mxu0 0.0
    %550 = vmatpush2.msra.mxu0 0.0
    %551 = vmatprep.subr.mxu0 0.0
    %552 = vmatpush2.msra.mxu0 0.0
    %553 = vmatprep.subr.mxu0 0.0
    %554 = vmatpush2.msra.mxu0 0.0
    %555 = vmatprep.subr.mxu0 0.0
    %556 = vmatpush2.msra.mxu0 0.0
    %557 = vmatprep.subr.mxu0 0.0
    %558 = vmatpush2.msra.mxu0 0.0
    %559 = vmatprep.subr.mxu0 0.0
    %560 = vmatpush2.msra.mxu0 0.0
    %561 = vmatprep.subr.mxu0 0.0
    %562 = vmatpush2.msra.mxu0 0.0
    %563 = vmatprep.subr.mxu0 0.0
    %564 = vmatpush2.msra.mxu0 0.0
    %565 = vmatprep.subr.mxu0 0.0
    %566 = vmatpush2.msra.mxu0 0.0
    %567 = vmatprep.subr.mxu0 0.0
    %568 = vmatpush2.msra.mxu0 0.0
    %569 = vmatprep.subr.mxu0 0.0
    %570 = vmatpush2.msra.mxu0 0.0
    %571 = vmatprep.subr.mxu0 0.0
    %572 = vmatpush2.msra.mxu0 0.0
    %573 = vmatprep.subr.mxu0 0.0
    %574 = vmatpush2.msra.mxu0 0.0
    %575 = vmatprep.subr.mxu0 0.0
    %576 = vmatpush2.msra.mxu0 0.0
    %577 = vmatprep.mubr.f32.mxu0 0.0
    %578 = vmatmul.mubr.f32.gmra.mxu0 %v511
    %v579 = vpop.f32.mrf.mxu0
    %v580 = vadd.f32 %v68, %v579
    %v581 = vpop.f32.mrf.mxu0
    %582 = vdwg.mxu0
    %v583 = vxor.u32 %v580, 2147483648
    %v584 = vmul.f32 %v583, 1.442695
    %v585 = vpow.pop %v584
    %v586 = vadd.f32 %v585, 1.0
    %v587 = vrcp.pop %v586
    %v588 = vmul.f32 1.0, %v587
    %v589 = vtanh.pop %v580
    %v590 = vmul.f32 %v588, %v499
    %592 = vrot.lane.b32.xlu0 %v589, 32
    %v593 = vpop.permute.xlu0 %592
    %v595 = vmul.f32 %v588, %v593
    %597 = vrot.lane.b32.xlu0 %v595, 32
    %v598 = vpop.permute.xlu0 %597
    %v600 = vadd.f32 %v590, %v598
    %v601 = vtanh.pop %v600
    %603 = vrot.lane.b32.xlu0 %v601, 32
    %v604 = vpop.permute.xlu0 %603
    %v606 = vmul.f32 %v588, %v604
    %608 = vrot.lane.b32.xlu0 %v606, 64
    %v609 = vpop.permute.xlu0 %608
    %611 = vst.msk [vmem:[#allocation2 + $0x10] sm:$0xff] %vm161, %v609
    %v612 = vsel %vm161, %v609, 0
    %614 = vmatprep.subr.mxu0 0.0
    %615 = vmatpush1.msra.mxu0 0.0
    %616 = vmatprep.subr.mxu0 0.0
    %617 = vmatpush1.msra.mxu0 0.0
    %618 = vmatprep.subr.mxu0 0.0
    %619 = vmatpush1.msra.mxu0 0.0
    %620 = vmatprep.subr.mxu0 0.0
    %621 = vmatpush1.msra.mxu0 0.0
    %622 = vmatprep.subr.mxu0 0.0
    %623 = vmatpush1.msra.mxu0 0.0
    %624 = vmatprep.subr.mxu0 0.0
    %625 = vmatpush1.msra.mxu0 0.0
    %626 = vmatprep.subr.mxu0 0.0
    %627 = vmatpush1.msra.mxu0 0.0
    %628 = vmatprep.subr.mxu0 0.0
    %629 = vmatpush1.msra.mxu0 0.0
    %630 = vmatprep.subr.mxu0 0.0
    %631 = vmatpush1.msra.mxu0 0.0
    %632 = vmatprep.subr.mxu0 0.0
    %633 = vmatpush1.msra.mxu0 0.0
    %634 = vmatprep.subr.mxu0 0.0
    %635 = vmatpush1.msra.mxu0 0.0
    %636 = vmatprep.subr.mxu0 0.0
    %637 = vmatpush1.msra.mxu0 0.0
    %638 = vmatprep.subr.mxu0 0.0
    %639 = vmatpush1.msra.mxu0 %v58
    %640 = vmatprep.subr.mxu0 0.0
    %641 = vmatpush1.msra.mxu0 %v57
    %642 = vmatprep.subr.mxu0 0.0
    %643 = vmatpush1.msra.mxu0 %v56
    %644 = vmatprep.subr.mxu0 0.0
    %645 = vmatpush1.msra.mxu0 %v55
    %646 = vmatprep.subr.mxu0 0.0
    %647 = vmatpush2.msra.mxu0 0.0
    %648 = vmatprep.subr.mxu0 0.0
    %649 = vmatpush2.msra.mxu0 0.0
    %650 = vmatprep.subr.mxu0 0.0
    %651 = vmatpush2.msra.mxu0 0.0
    %652 = vmatprep.subr.mxu0 0.0
    %653 = vmatpush2.msra.mxu0 0.0
    %654 = vmatprep.subr.mxu0 0.0
    %655 = vmatpush2.msra.mxu0 0.0
    %656 = vmatprep.subr.mxu0 0.0
    %657 = vmatpush2.msra.mxu0 0.0
    %658 = vmatprep.subr.mxu0 0.0
    %659 = vmatpush2.msra.mxu0 0.0
    %660 = vmatprep.subr.mxu0 0.0
    %661 = vmatpush2.msra.mxu0 0.0
    %662 = vmatprep.subr.mxu0 0.0
    %663 = vmatpush2.msra.mxu0 0.0
    %664 = vmatprep.subr.mxu0 0.0
    %665 = vmatpush2.msra.mxu0 0.0
    %666 = vmatprep.subr.mxu0 0.0
    %667 = vmatpush2.msra.mxu0 0.0
    %668 = vmatprep.subr.mxu0 0.0
    %669 = vmatpush2.msra.mxu0 0.0
    %670 = vmatprep.subr.mxu0 0.0
    %671 = vmatpush2.msra.mxu0 0.0
    %672 = vmatprep.subr.mxu0 0.0
    %673 = vmatpush2.msra.mxu0 0.0
    %674 = vmatprep.subr.mxu0 0.0
    %675 = vmatpush2.msra.mxu0 0.0
    %676 = vmatprep.subr.mxu0 0.0
    %677 = vmatpush2.msra.mxu0 0.0
    %678 = vmatprep.mubr.f32.mxu0 0.0
    %679 = vmatmul.mubr.f32.gmra.mxu0 %v612
    %v680 = vpop.f32.mrf.mxu0
    %v681 = vadd.f32 %v68, %v680
    %v682 = vpop.f32.mrf.mxu0
    %683 = vdwg.mxu0
    %v684 = vxor.u32 %v681, 2147483648
    %v685 = vmul.f32 %v684, 1.442695
    %v686 = vpow.pop %v685
    %v687 = vadd.f32 %v686, 1.0
    %v688 = vrcp.pop %v687
    %v689 = vmul.f32 1.0, %v688
    %v690 = vtanh.pop %v681
    %v691 = vmul.f32 %v689, %v600
    %693 = vrot.lane.b32.xlu0 %v690, 32
    %v694 = vpop.permute.xlu0 %693
    %v696 = vmul.f32 %v689, %v694
    %698 = vrot.lane.b32.xlu0 %v696, 32
    %v699 = vpop.permute.xlu0 %698
    %v701 = vadd.f32 %v691, %v699
    %v702 = vtanh.pop %v701
    %704 = vrot.lane.b32.xlu0 %v702, 32
    %v705 = vpop.permute.xlu0 %704
    %v707 = vmul.f32 %v689, %v705
    %709 = vrot.lane.b32.xlu0 %v707, 64
    %v710 = vpop.permute.xlu0 %709
    %712 = vst.msk [vmem:[#allocation2 + $0x18] sm:$0xff] %vm161, %v710
    %v713 = vsel %vm161, %v710, 0
    %715 = vmatprep.subr.mxu0 0.0
    %716 = vmatpush1.msra.mxu0 0.0
    %717 = vmatprep.subr.mxu0 0.0
    %718 = vmatpush1.msra.mxu0 0.0
    %719 = vmatprep.subr.mxu0 0.0
    %720 = vmatpush1.msra.mxu0 0.0
    %721 = vmatprep.subr.mxu0 0.0
    %722 = vmatpush1.msra.mxu0 0.0
    %723 = vmatprep.subr.mxu0 0.0
    %724 = vmatpush1.msra.mxu0 0.0
    %725 = vmatprep.subr.mxu0 0.0
    %726 = vmatpush1.msra.mxu0 0.0
    %727 = vmatprep.subr.mxu0 0.0
    %728 = vmatpush1.msra.mxu0 0.0
    %729 = vmatprep.subr.mxu0 0.0
    %730 = vmatpush1.msra.mxu0 0.0
    %731 = vmatprep.subr.mxu0 0.0
    %732 = vmatpush1.msra.mxu0 0.0
    %733 = vmatprep.subr.mxu0 0.0
    %734 = vmatpush1.msra.mxu0 0.0
    %735 = vmatprep.subr.mxu0 0.0
    %736 = vmatpush1.msra.mxu0 0.0
    %737 = vmatprep.subr.mxu0 0.0
    %738 = vmatpush1.msra.mxu0 0.0
    %739 = vmatprep.subr.mxu0 0.0
    %740 = vmatpush1.msra.mxu0 %v58
    %741 = vmatprep.subr.mxu0 0.0
    %742 = vmatpush1.msra.mxu0 %v57
    %743 = vmatprep.subr.mxu0 0.0
    %744 = vmatpush1.msra.mxu0 %v56
    %745 = vmatprep.subr.mxu0 0.0
    %746 = vmatpush1.msra.mxu0 %v55
    %747 = vmatprep.subr.mxu0 0.0
    %748 = vmatpush2.msra.mxu0 0.0
    %749 = vmatprep.subr.mxu0 0.0
    %750 = vmatpush2.msra.mxu0 0.0
    %751 = vmatprep.subr.mxu0 0.0
    %752 = vmatpush2.msra.mxu0 0.0
    %753 = vmatprep.subr.mxu0 0.0
    %754 = vmatpush2.msra.mxu0 0.0
    %755 = vmatprep.subr.mxu0 0.0
    %756 = vmatpush2.msra.mxu0 0.0
    %757 = vmatprep.subr.mxu0 0.0
    %758 = vmatpush2.msra.mxu0 0.0
    %759 = vmatprep.subr.mxu0 0.0
    %760 = vmatpush2.msra.mxu0 0.0
    %761 = vmatprep.subr.mxu0 0.0
    %762 = vmatpush2.msra.mxu0 0.0
    %763 = vmatprep.subr.mxu0 0.0
    %764 = vmatpush2.msra.mxu0 0.0
    %765 = vmatprep.subr.mxu0 0.0
    %766 = vmatpush2.msra.mxu0 0.0
    %767 = vmatprep.subr.mxu0 0.0
    %768 = vmatpush2.msra.mxu0 0.0
    %769 = vmatprep.subr.mxu0 0.0
    %770 = vmatpush2.msra.mxu0 0.0
    %771 = vmatprep.subr.mxu0 0.0
    %772 = vmatpush2.msra.mxu0 0.0
    %773 = vmatprep.subr.mxu0 0.0
    %774 = vmatpush2.msra.mxu0 0.0
    %775 = vmatprep.subr.mxu0 0.0
    %776 = vmatpush2.msra.mxu0 0.0
    %777 = vmatprep.subr.mxu0 0.0
    %778 = vmatpush2.msra.mxu0 0.0
    %779 = vmatprep.mubr.f32.mxu0 0.0
    %780 = vmatmul.mubr.f32.gmra.mxu0 %v713
    %v781 = vpop.f32.mrf.mxu0
    %v782 = vadd.f32 %v68, %v781
    %v783 = vpop.f32.mrf.mxu0
    %784 = vdwg.mxu0
    %v785 = vxor.u32 %v782, 2147483648
    %v786 = vmul.f32 %v785, 1.442695
    %v787 = vpow.pop %v786
    %v788 = vadd.f32 %v787, 1.0
    %v789 = vrcp.pop %v788
    %v790 = vmul.f32 1.0, %v789
    %v791 = vtanh.pop %v782
    %v792 = vmul.f32 %v790, %v701
    %794 = vrot.lane.b32.xlu0 %v791, 32
    %v795 = vpop.permute.xlu0 %794
    %v797 = vmul.f32 %v790, %v795
    %799 = vrot.lane.b32.xlu0 %v797, 32
    %v800 = vpop.permute.xlu0 %799
    %v802 = vadd.f32 %v792, %v800
    %v803 = vtanh.pop %v802
    %805 = vrot.lane.b32.xlu0 %v803, 32
    %v806 = vpop.permute.xlu0 %805
    %v808 = vmul.f32 %v790, %v806
    %810 = vrot.lane.b32.xlu0 %v808, 64
    %v811 = vpop.permute.xlu0 %810
    %813 = vst.msk [vmem:[#allocation2 + $0x20] sm:$0xff] %vm161, %v811
    %v814 = vsel %vm161, %v811, 0
    %816 = vmatprep.subr.mxu0 0.0
    %817 = vmatpush1.msra.mxu0 0.0
    %818 = vmatprep.subr.mxu0 0.0
    %819 = vmatpush1.msra.mxu0 0.0
    %820 = vmatprep.subr.mxu0 0.0
    %821 = vmatpush1.msra.mxu0 0.0
    %822 = vmatprep.subr.mxu0 0.0
    %823 = vmatpush1.msra.mxu0 0.0
    %824 = vmatprep.subr.mxu0 0.0
    %825 = vmatpush1.msra.mxu0 0.0
    %826 = vmatprep.subr.mxu0 0.0
    %827 = vmatpush1.msra.mxu0 0.0
    %828 = vmatprep.subr.mxu0 0.0
    %829 = vmatpush1.msra.mxu0 0.0
    %830 = vmatprep.subr.mxu0 0.0
    %831 = vmatpush1.msra.mxu0 0.0
    %832 = vmatprep.subr.mxu0 0.0
    %833 = vmatpush1.msra.mxu0 0.0
    %834 = vmatprep.subr.mxu0 0.0
    %835 = vmatpush1.msra.mxu0 0.0
    %836 = vmatprep.subr.mxu0 0.0
    %837 = vmatpush1.msra.mxu0 0.0
    %838 = vmatprep.subr.mxu0 0.0
    %839 = vmatpush1.msra.mxu0 0.0
    %840 = vmatprep.subr.mxu0 0.0
    %841 = vmatpush1.msra.mxu0 %v58
    %842 = vmatprep.subr.mxu0 0.0
    %843 = vmatpush1.msra.mxu0 %v57
    %844 = vmatprep.subr.mxu0 0.0
    %845 = vmatpush1.msra.mxu0 %v56
    %846 = vmatprep.subr.mxu0 0.0
    %847 = vmatpush1.msra.mxu0 %v55
    %848 = vmatprep.subr.mxu0 0.0
    %849 = vmatpush2.msra.mxu0 0.0
    %850 = vmatprep.subr.mxu0 0.0
    %851 = vmatpush2.msra.mxu0 0.0
    %852 = vmatprep.subr.mxu0 0.0
    %853 = vmatpush2.msra.mxu0 0.0
    %854 = vmatprep.subr.mxu0 0.0
    %855 = vmatpush2.msra.mxu0 0.0
    %856 = vmatprep.subr.mxu0 0.0
    %857 = vmatpush2.msra.mxu0 0.0
    %858 = vmatprep.subr.mxu0 0.0
    %859 = vmatpush2.msra.mxu0 0.0
    %860 = vmatprep.subr.mxu0 0.0
    %861 = vmatpush2.msra.mxu0 0.0
    %862 = vmatprep.subr.mxu0 0.0
    %863 = vmatpush2.msra.mxu0 0.0
    %864 = vmatprep.subr.mxu0 0.0
    %865 = vmatpush2.msra.mxu0 0.0
    %866 = vmatprep.subr.mxu0 0.0
    %867 = vmatpush2.msra.mxu0 0.0
    %868 = vmatprep.subr.mxu0 0.0
    %869 = vmatpush2.msra.mxu0 0.0
    %870 = vmatprep.subr.mxu0 0.0
    %871 = vmatpush2.msra.mxu0 0.0
    %872 = vmatprep.subr.mxu0 0.0
    %873 = vmatpush2.msra.mxu0 0.0
    %874 = vmatprep.subr.mxu0 0.0
    %875 = vmatpush2.msra.mxu0 0.0
    %876 = vmatprep.subr.mxu0 0.0
    %877 = vmatpush2.msra.mxu0 0.0
    %878 = vmatprep.subr.mxu0 0.0
    %879 = vmatpush2.msra.mxu0 0.0
    %880 = vmatprep.mubr.f32.mxu0 0.0
    %881 = vmatmul.mubr.f32.gmra.mxu0 %v814
    %v882 = vpop.f32.mrf.mxu0
    %v883 = vadd.f32 %v68, %v882
    %v884 = vpop.f32.mrf.mxu0
    %885 = vdwg.mxu0
    %v886 = vxor.u32 %v883, 2147483648
    %v887 = vmul.f32 %v886, 1.442695
    %v888 = vpow.pop %v887
    %v889 = vadd.f32 %v888, 1.0
    %v890 = vrcp.pop %v889
    %v891 = vmul.f32 1.0, %v890
    %v892 = vtanh.pop %v883
    %v893 = vmul.f32 %v891, %v802
    %895 = vrot.lane.b32.xlu0 %v892, 32
    %v896 = vpop.permute.xlu0 %895
    %v898 = vmul.f32 %v891, %v896
    %900 = vrot.lane.b32.xlu0 %v898, 32
    %v901 = vpop.permute.xlu0 %900
    %v903 = vadd.f32 %v893, %v901
    %v904 = vtanh.pop %v903
    %906 = vrot.lane.b32.xlu0 %v904, 32
    %v907 = vpop.permute.xlu0 %906
    %v909 = vmul.f32 %v891, %v907
    %911 = vrot.lane.b32.xlu0 %v909, 64
    %v912 = vpop.permute.xlu0 %911
    %914 = vst.msk [vmem:[#allocation2 + $0x28] sm:$0xff] %vm161, %v912
    %v915 = vsel %vm161, %v912, 0
    %917 = vmatprep.subr.mxu0 0.0
    %918 = vmatpush1.msra.mxu0 0.0
    %919 = vmatprep.subr.mxu0 0.0
    %920 = vmatpush1.msra.mxu0 0.0
    %921 = vmatprep.subr.mxu0 0.0
    %922 = vmatpush1.msra.mxu0 0.0
    %923 = vmatprep.subr.mxu0 0.0
    %924 = vmatpush1.msra.mxu0 0.0
    %925 = vmatprep.subr.mxu0 0.0
    %926 = vmatpush1.msra.mxu0 0.0
    %927 = vmatprep.subr.mxu0 0.0
    %928 = vmatpush1.msra.mxu0 0.0
    %929 = vmatprep.subr.mxu0 0.0
    %930 = vmatpush1.msra.mxu0 0.0
    %931 = vmatprep.subr.mxu0 0.0
    %932 = vmatpush1.msra.mxu0 0.0
    %933 = vmatprep.subr.mxu0 0.0
    %934 = vmatpush1.msra.mxu0 0.0
    %935 = vmatprep.subr.mxu0 0.0
    %936 = vmatpush1.msra.mxu0 0.0
    %937 = vmatprep.subr.mxu0 0.0
    %938 = vmatpush1.msra.mxu0 0.0
    %939 = vmatprep.subr.mxu0 0.0
    %940 = vmatpush1.msra.mxu0 0.0
    %941 = vmatprep.subr.mxu0 0.0
    %942 = vmatpush1.msra.mxu0 %v58
    %943 = vmatprep.subr.mxu0 0.0
    %944 = vmatpush1.msra.mxu0 %v57
    %945 = vmatprep.subr.mxu0 0.0
    %946 = vmatpush1.msra.mxu0 %v56
    %947 = vmatprep.subr.mxu0 0.0
    %948 = vmatpush1.msra.mxu0 %v55
    %949 = vmatprep.subr.mxu0 0.0
    %950 = vmatpush2.msra.mxu0 0.0
    %951 = vmatprep.subr.mxu0 0.0
    %952 = vmatpush2.msra.mxu0 0.0
    %953 = vmatprep.subr.mxu0 0.0
    %954 = vmatpush2.msra.mxu0 0.0
    %955 = vmatprep.subr.mxu0 0.0
    %956 = vmatpush2.msra.mxu0 0.0
    %957 = vmatprep.subr.mxu0 0.0
    %958 = vmatpush2.msra.mxu0 0.0
    %959 = vmatprep.subr.mxu0 0.0
    %960 = vmatpush2.msra.mxu0 0.0
    %961 = vmatprep.subr.mxu0 0.0
    %962 = vmatpush2.msra.mxu0 0.0
    %963 = vmatprep.subr.mxu0 0.0
    %964 = vmatpush2.msra.mxu0 0.0
    %965 = vmatprep.subr.mxu0 0.0
    %966 = vmatpush2.msra.mxu0 0.0
    %967 = vmatprep.subr.mxu0 0.0
    %968 = vmatpush2.msra.mxu0 0.0
    %969 = vmatprep.subr.mxu0 0.0
    %970 = vmatpush2.msra.mxu0 0.0
    %971 = vmatprep.subr.mxu0 0.0
    %972 = vmatpush2.msra.mxu0 0.0
    %973 = vmatprep.subr.mxu0 0.0
    %974 = vmatpush2.msra.mxu0 0.0
    %975 = vmatprep.subr.mxu0 0.0
    %976 = vmatpush2.msra.mxu0 0.0
    %977 = vmatprep.subr.mxu0 0.0
    %978 = vmatpush2.msra.mxu0 0.0
    %979 = vmatprep.subr.mxu0 0.0
    %980 = vmatpush2.msra.mxu0 0.0
    %981 = vmatprep.mubr.f32.mxu0 0.0
    %982 = vmatmul.mubr.f32.gmra.mxu0 %v915
    %v983 = vpop.f32.mrf.mxu0
    %v984 = vadd.f32 %v68, %v983
    %v985 = vpop.f32.mrf.mxu0
    %986 = vdwg.mxu0
    %v987 = vxor.u32 %v984, 2147483648
    %v988 = vmul.f32 %v987, 1.442695
    %v989 = vpow.pop %v988
    %v990 = vadd.f32 %v989, 1.0
    %v991 = vrcp.pop %v990
    %v992 = vmul.f32 1.0, %v991
    %v993 = vtanh.pop %v984
    %v994 = vmul.f32 %v992, %v903
    %996 = vrot.lane.b32.xlu0 %v993, 32
    %v997 = vpop.permute.xlu0 %996
    %v999 = vmul.f32 %v992, %v997
    %1001 = vrot.lane.b32.xlu0 %v999, 32
    %v1002 = vpop.permute.xlu0 %1001
    %v1004 = vadd.f32 %v994, %v1002
    %v1005 = vtanh.pop %v1004
    %1007 = vrot.lane.b32.xlu0 %v1005, 32
    %v1008 = vpop.permute.xlu0 %1007
    %v1010 = vmul.f32 %v992, %v1008
    %1012 = vrot.lane.b32.xlu0 %v1010, 64
    %v1013 = vpop.permute.xlu0 %1012
    %1015 = vst.msk [vmem:[#allocation2 + $0x30] sm:$0xff] %vm161, %v1013
    %v1016 = vsel %vm161, %v1013, 0
    %1018 = vmatprep.subr.mxu0 0.0
    %1019 = vmatpush1.msra.mxu0 0.0
    %1020 = vmatprep.subr.mxu0 0.0
    %1021 = vmatpush1.msra.mxu0 0.0
    %1022 = vmatprep.subr.mxu0 0.0
    %1023 = vmatpush1.msra.mxu0 0.0
    %1024 = vmatprep.subr.mxu0 0.0
    %1025 = vmatpush1.msra.mxu0 0.0
    %1026 = vmatprep.subr.mxu0 0.0
    %1027 = vmatpush1.msra.mxu0 0.0
    %1028 = vmatprep.subr.mxu0 0.0
    %1029 = vmatpush1.msra.mxu0 0.0
    %1030 = vmatprep.subr.mxu0 0.0
    %1031 = vmatpush1.msra.mxu0 0.0
    %1032 = vmatprep.subr.mxu0 0.0
    %1033 = vmatpush1.msra.mxu0 0.0
    %1034 = vmatprep.subr.mxu0 0.0
    %1035 = vmatpush1.msra.mxu0 0.0
    %1036 = vmatprep.subr.mxu0 0.0
    %1037 = vmatpush1.msra.mxu0 0.0
    %1038 = vmatprep.subr.mxu0 0.0
    %1039 = vmatpush1.msra.mxu0 0.0
    %1040 = vmatprep.subr.mxu0 0.0
    %1041 = vmatpush1.msra.mxu0 0.0
    %1042 = vmatprep.subr.mxu0 0.0
    %1043 = vmatpush1.msra.mxu0 %v58
    %1044 = vmatprep.subr.mxu0 0.0
    %1045 = vmatpush1.msra.mxu0 %v57
    %1046 = vmatprep.subr.mxu0 0.0
    %1047 = vmatpush1.msra.mxu0 %v56
    %1048 = vmatprep.subr.mxu0 0.0
    %1049 = vmatpush1.msra.mxu0 %v55
    %1050 = vmatprep.subr.mxu0 0.0
    %1051 = vmatpush2.msra.mxu0 0.0
    %1052 = vmatprep.subr.mxu0 0.0
    %1053 = vmatpush2.msra.mxu0 0.0
    %1054 = vmatprep.subr.mxu0 0.0
    %1055 = vmatpush2.msra.mxu0 0.0
    %1056 = vmatprep.subr.mxu0 0.0
    %1057 = vmatpush2.msra.mxu0 0.0
    %1058 = vmatprep.subr.mxu0 0.0
    %1059 = vmatpush2.msra.mxu0 0.0
    %1060 = vmatprep.subr.mxu0 0.0
    %1061 = vmatpush2.msra.mxu0 0.0
    %1062 = vmatprep.subr.mxu0 0.0
    %1063 = vmatpush2.msra.mxu0 0.0
    %1064 = vmatprep.subr.mxu0 0.0
    %1065 = vmatpush2.msra.mxu0 0.0
    %1066 = vmatprep.subr.mxu0 0.0
    %1067 = vmatpush2.msra.mxu0 0.0
    %1068 = vmatprep.subr.mxu0 0.0
    %1069 = vmatpush2.msra.mxu0 0.0
    %1070 = vmatprep.subr.mxu0 0.0
    %1071 = vmatpush2.msra.mxu0 0.0
    %1072 = vmatprep.subr.mxu0 0.0
    %1073 = vmatpush2.msra.mxu0 0.0
    %1074 = vmatprep.subr.mxu0 0.0
    %1075 = vmatpush2.msra.mxu0 0.0
    %1076 = vmatprep.subr.mxu0 0.0
    %1077 = vmatpush2.msra.mxu0 0.0
    %1078 = vmatprep.subr.mxu0 0.0
    %1079 = vmatpush2.msra.mxu0 0.0
    %1080 = vmatprep.subr.mxu0 0.0
    %1081 = vmatpush2.msra.mxu0 0.0
    %1082 = vmatprep.mubr.f32.mxu0 0.0
    %1083 = vmatmul.mubr.f32.gmra.mxu0 %v1016
    %v1084 = vpop.f32.mrf.mxu0
    %v1085 = vadd.f32 %v68, %v1084
    %v1086 = vpop.f32.mrf.mxu0
    %1087 = vdwg.mxu0
    %v1088 = vxor.u32 %v1085, 2147483648
    %v1089 = vmul.f32 %v1088, 1.442695
    %v1090 = vpow.pop %v1089
    %v1091 = vadd.f32 %v1090, 1.0
    %v1092 = vrcp.pop %v1091
    %v1093 = vmul.f32 1.0, %v1092
    %v1094 = vtanh.pop %v1085
    %v1095 = vmul.f32 %v1093, %v1004
    %1097 = vrot.lane.b32.xlu0 %v1094, 32
    %v1098 = vpop.permute.xlu0 %1097
    %v1100 = vmul.f32 %v1093, %v1098
    %1102 = vrot.lane.b32.xlu0 %v1100, 32
    %v1103 = vpop.permute.xlu0 %1102
    %v1105 = vadd.f32 %v1095, %v1103
    %v1106 = vtanh.pop %v1105
    %1108 = vrot.lane.b32.xlu0 %v1106, 32
    %v1109 = vpop.permute.xlu0 %1108
    %v1111 = vmul.f32 %v1093, %v1109
    %1113 = vrot.lane.b32.xlu0 %v1111, 64
    %v1114 = vpop.permute.xlu0 %1113
    %1116 = vst.msk [vmem:[#allocation2 + $0x38] sm:$0xff] %vm161, %v1114
    %v1117 = vld [vmem:[#allocation2] sm:$0xff]
    %v1118 = vld [vmem:[#allocation2 + $0x8] sm:$0xff]
    %v1119 = vld [vmem:[#allocation2 + $0x10] sm:$0xff]
    %v1120 = vld [vmem:[#allocation2 + $0x18] sm:$0xff]
    %v1121 = vld [vmem:[#allocation2 + $0x20] sm:$0xff]
    %v1122 = vld [vmem:[#allocation2 + $0x28] sm:$0xff]
    %v1123 = vld [vmem:[#allocation2 + $0x30] sm:$0xff]
    %v1124 = vld [vmem:[#allocation2 + $0x38] sm:$0xff]
    %v1125 = vld [vmem:[%s7] sm:$0x1]
    %v1127 = vlaneseq
    %v1128 = vshrl.u32 %v1127, 7
    %v1129 = vsub.s32 0, %v1128
    %v1130 = vrot.slane %v1125, %v1129
    %v1133 = vsel %vm161, %v1117, 0
    %v1136 = vsel %vm161, %v1118, 0
    %v1139 = vsel %vm161, %v1119, 0
    %v1142 = vsel %vm161, %v1120, 0
    %v1145 = vsel %vm161, %v1121, 0
    %v1148 = vsel %vm161, %v1122, 0
    %v1151 = vsel %vm161, %v1123, 0
    %v1154 = vsel %vm161, %v1124, 0
    %1156 = vmatprep.subr.mxu0 0.0
    %1157 = vmatpush1.msra.mxu0 0.0
    %1158 = vmatprep.subr.mxu0 0.0
    %1159 = vmatpush1.msra.mxu0 0.0
    %1160 = vmatprep.subr.mxu0 0.0
    %1161 = vmatpush1.msra.mxu0 0.0
    %1162 = vmatprep.subr.mxu0 0.0
    %1163 = vmatpush1.msra.mxu0 0.0
    %1164 = vmatprep.subr.mxu0 0.0
    %1165 = vmatpush1.msra.mxu0 0.0
    %1166 = vmatprep.subr.mxu0 0.0
    %1167 = vmatpush1.msra.mxu0 0.0
    %1168 = vmatprep.subr.mxu0 0.0
    %1169 = vmatpush1.msra.mxu0 0.0
    %1170 = vmatprep.subr.mxu0 0.0
    %1171 = vmatpush1.msra.mxu0 0.0
    %1172 = vmatprep.subr.mxu0 0.0
    %1173 = vmatpush1.msra.mxu0 0.0
    %1174 = vmatprep.subr.mxu0 0.0
    %1175 = vmatpush1.msra.mxu0 0.0
    %1176 = vmatprep.subr.mxu0 0.0
    %1177 = vmatpush1.msra.mxu0 0.0
    %1178 = vmatprep.subr.mxu0 0.0
    %1179 = vmatpush1.msra.mxu0 0.0
    %1180 = vmatprep.subr.mxu0 0.0
    %1181 = vmatpush1.msra.mxu0 %v62
    %1182 = vmatprep.subr.mxu0 0.0
    %1183 = vmatpush1.msra.mxu0 %v61
    %1184 = vmatprep.subr.mxu0 0.0
    %1185 = vmatpush1.msra.mxu0 %v60
    %1186 = vmatprep.subr.mxu0 0.0
    %1187 = vmatpush1.msra.mxu0 %v59
    %1188 = vmatprep.subr.mxu0 0.0
    %1189 = vmatpush2.msra.mxu0 0.0
    %1190 = vmatprep.subr.mxu0 0.0
    %1191 = vmatpush2.msra.mxu0 0.0
    %1192 = vmatprep.subr.mxu0 0.0
    %1193 = vmatpush2.msra.mxu0 0.0
    %1194 = vmatprep.subr.mxu0 0.0
    %1195 = vmatpush2.msra.mxu0 0.0
    %1196 = vmatprep.subr.mxu0 0.0
    %1197 = vmatpush2.msra.mxu0 0.0
    %1198 = vmatprep.subr.mxu0 0.0
    %1199 = vmatpush2.msra.mxu0 0.0
    %1200 = vmatprep.subr.mxu0 0.0
    %1201 = vmatpush2.msra.mxu0 0.0
    %1202 = vmatprep.subr.mxu0 0.0
    %1203 = vmatpush2.msra.mxu0 0.0
    %1204 = vmatprep.subr.mxu0 0.0
    %1205 = vmatpush2.msra.mxu0 0.0
    %1206 = vmatprep.subr.mxu0 0.0
    %1207 = vmatpush2.msra.mxu0 0.0
    %1208 = vmatprep.subr.mxu0 0.0
    %1209 = vmatpush2.msra.mxu0 0.0
    %1210 = vmatprep.subr.mxu0 0.0
    %1211 = vmatpush2.msra.mxu0 0.0
    %1212 = vmatprep.subr.mxu0 0.0
    %1213 = vmatpush2.msra.mxu0 0.0
    %1214 = vmatprep.subr.mxu0 0.0
    %1215 = vmatpush2.msra.mxu0 0.0
    %1216 = vmatprep.subr.mxu0 0.0
    %1217 = vmatpush2.msra.mxu0 0.0
    %1218 = vmatprep.subr.mxu0 0.0
    %1219 = vmatpush2.msra.mxu0 0.0
    %1220 = vmatprep.mubr.f32.mxu0 0.0
    %1221 = vmatmul.mubr.f32.gmra.mxu0 %v1133
    %v1222 = vpop.f32.mrf.mxu0
    %v1223 = vadd.f32 %v1130, %v1222
    %v1224 = vpop.f32.mrf.mxu0
    %1225 = vmatprep.mubr.f32.mxu0 0.0
    %1226 = vmatmul.mubr.f32.gmra.mxu0 %v1136
    %v1227 = vpop.f32.mrf.mxu0
    %v1228 = vadd.f32 %v1130, %v1227
    %v1229 = vpop.f32.mrf.mxu0
    %1230 = vmatprep.mubr.f32.mxu0 0.0
    %1231 = vmatmul.mubr.f32.gmra.mxu0 %v1139
    %v1232 = vpop.f32.mrf.mxu0
    %v1233 = vadd.f32 %v1130, %v1232
    %v1234 = vpop.f32.mrf.mxu0
    %1235 = vmatprep.mubr.f32.mxu0 0.0
    %1236 = vmatmul.mubr.f32.gmra.mxu0 %v1142
    %v1237 = vpop.f32.mrf.mxu0
    %v1238 = vadd.f32 %v1130, %v1237
    %v1239 = vpop.f32.mrf.mxu0
    %1240 = vmatprep.mubr.f32.mxu0 0.0
    %1241 = vmatmul.mubr.f32.gmra.mxu0 %v1145
    %v1242 = vpop.f32.mrf.mxu0
    %v1243 = vadd.f32 %v1130, %v1242
    %v1244 = vpop.f32.mrf.mxu0
    %1245 = vmatprep.mubr.f32.mxu0 0.0
    %1246 = vmatmul.mubr.f32.gmra.mxu0 %v1148
    %v1247 = vpop.f32.mrf.mxu0
    %v1248 = vadd.f32 %v1130, %v1247
    %v1249 = vpop.f32.mrf.mxu0
    %1250 = vmatprep.mubr.f32.mxu0 0.0
    %1251 = vmatmul.mubr.f32.gmra.mxu0 %v1151
    %v1252 = vpop.f32.mrf.mxu0
    %v1253 = vadd.f32 %v1130, %v1252
    %v1254 = vpop.f32.mrf.mxu0
    %1255 = vmatprep.mubr.f32.mxu0 0.0
    %1256 = vmatmul.mubr.f32.gmra.mxu0 %v1154
    %v1257 = vpop.f32.mrf.mxu0
    %v1258 = vadd.f32 %v1130, %v1257
    %v1259 = vpop.f32.mrf.mxu0
    %1260 = vdwg.mxu0
    %1261 = vst.msk [vmem:[%s8] sm:$0xff] %vm236, %v1223
    %1262 = vst.msk [vmem:[%s8 + $0x8] sm:$0xff] %vm236, %v1228
    %1263 = vst.msk [vmem:[%s8 + $0x10] sm:$0xff] %vm236, %v1233
    %1264 = vst.msk [vmem:[%s8 + $0x18] sm:$0xff] %vm236, %v1238
    %1265 = vst.msk [vmem:[%s8 + $0x20] sm:$0xff] %vm236, %v1243
    %1266 = vst.msk [vmem:[%s8 + $0x28] sm:$0xff] %vm236, %v1248
    %1267 = vst.msk [vmem:[%s8 + $0x30] sm:$0xff] %vm236, %v1253
    %1268 = vst.msk [vmem:[%s8 + $0x38] sm:$0xff] %vm236, %v1258
    // Predicated region
    $region42: #{tpu_custom_call.1} parent=1 // pred_check
      _
    $region43: #{tpu_custom_call.1} parent=1 // pred_check_branch
      %1270 = sbr.rel (0) target = $region45
    $region44: #{tpu_custom_call.1} parent=1 // pred_region
      _
    $region45: #{tpu_custom_call.1} parent=1 // pred_fallthru
      _
    // Predicated region
    $region46: #{tpu_custom_call.1} parent=1 // pred_check
      _
    $region47: #{tpu_custom_call.1} parent=1 // pred_check_branch
      %1272 = sbr.rel (0) target = $region49
    $region48: #{tpu_custom_call.1} parent=1 // pred_region
      _
    $region49: #{tpu_custom_call.1} parent=1 // pred_fallthru
      _
    %1273 = vsyncpa [#allocation4], 1
    %1274 = vsyncpa [#allocation6], 1

</llo_original>
